<compile_context>
chip_gen: v6e
topology: v6e:2x2x1
jax: 0.10.0
libtpu: 0.0.40
codegen_flags: <defaults>
</compile_context>

<pallas_src>
import functools

import jax
import jax.numpy as jnp
from jax import lax
from jax.experimental import pallas as pl
from jax.experimental.pallas import tpu as pltpu


def _round_up(x, m):
    return ((x + m - 1) // m) * m


def _conv_stats_kernel(w_ref, p_ref, y_ref, sum_ref, sq_ref):
    """Per (n, s, c) tile: bf16 matmul (f32 acc) + per-tile partial channel stats."""
    # w_ref: (tile_c, F_pad) bf16 ; p_ref: (1, F_pad, tile_s) bf16
    y = jnp.dot(w_ref[...], p_ref[0], preferred_element_type=jnp.float32)
    y_ref[0] = y.astype(y_ref.dtype)                       # bf16 intermediate
    # Cross-lane reductions use the (otherwise idle) XLU; stores are tiny.
    sum_ref[0, 0] = jnp.sum(y, axis=1, keepdims=True)      # (tile_c, 1)
    sq_ref[0, 0] = jnp.sum(y * y, axis=1, keepdims=True)   # (tile_c, 1)


def _bn_relu_kernel(y_ref, scale_ref, shift_ref, o_ref):
    """Streaming fused BN (pre-folded per-channel scale/shift) + ReLU."""
    y = y_ref[0].astype(jnp.float32)                        # (C_pad, tile_s2)
    o_ref[0] = jnp.maximum(y * scale_ref[...] + shift_ref[...], 0.0)


@functools.partial(jax.jit, static_argnames=("stride", "padding", "eps"))
def conv_block(x, weight, bias, gamma, beta, *, stride=1, padding=0, eps=1e-5):
    """ConvBlock forward: Conv2d -> BatchNorm2d(training batch stats) -> ReLU.

    x:      (N, C_in, H, W)        NCHW, like PyTorch
    weight: (C_out, C_in, K, K)    OIHW, like PyTorch
    bias, gamma, beta: (C_out,)
    returns (N, C_out, H_out, W_out) float32
    """
    N, C_in, H, W = x.shape
    C_out, _, K, _ = weight.shape
    H_out = (H + 2 * padding - K) // stride + 1
    W_out = (W + 2 * padding - K) // stride + 1
    S = H_out * W_out
    F = C_in * K * K

    # Conv bias followed by train-mode BatchNorm is mathematically a no-op
    # (it only shifts the per-channel mean, which BN subtracts) -> drop it.
    del bias

    # ---- tiling -------------------------------------------------------------
    F_pad = _round_up(F, 128)
    C_pad = _round_up(C_out, 128)
    tile_c = 256 if C_pad % 256 == 0 else 128        # match 256-wide MXU on v6e/v7x
    tile_s = min(512, _round_up(S, 128))             # lane-dense spatial tile
    S_pad = _round_up(S, tile_s)
    n_s = S_pad // tile_s
    n_c = C_pad // tile_c

    # ---- glue: im2col in plain JAX, bf16, no 5-D transpose -------------------
    # Feature index = c*K*K + kh*K + kw, matching weight.reshape(C_out, C_in*K*K);
    # only contiguous dim-merges are needed (no big relayout).
    xp = jnp.pad(x.astype(jnp.bfloat16),
                 ((0, 0), (0, 0), (padding, padding), (padding, padding)))
    cols = []
    for kh in range(K):
        for kw in range(K):
            cols.append(xp[:, :, kh:kh + stride * H_out:stride,
                              kw:kw + stride * W_out:stride])
    patches = jnp.stack(cols, axis=2).reshape(N, F, S)
    patches = jnp.pad(patches, ((0, 0), (0, F_pad - F), (0, S_pad - S)))

    w_mat = jnp.pad(weight.astype(jnp.bfloat16).reshape(C_out, F),
                    ((0, C_pad - C_out), (0, F_pad - F)))

    # ---- pass 1: conv matmul + per-tile partial channel stats ----------------
    conv_out, sum_parts, sq_parts = pl.pallas_call(
        _conv_stats_kernel,
        out_shape=(jax.ShapeDtypeStruct((N, C_pad, S_pad), jnp.bfloat16),
                   jax.ShapeDtypeStruct((N, n_s, C_pad, 1), jnp.float32),
                   jax.ShapeDtypeStruct((N, n_s, C_pad, 1), jnp.float32)),
        grid=(N, n_s, n_c),   # channel axis innermost: patch block stays resident
        in_specs=[pl.BlockSpec((tile_c, F_pad), lambda n, s, c: (c, 0)),
                  pl.BlockSpec((1, F_pad, tile_s), lambda n, s, c: (n, 0, s))],
        out_specs=(pl.BlockSpec((1, tile_c, tile_s), lambda n, s, c: (n, c, s)),
                   pl.BlockSpec((1, 1, tile_c, 1), lambda n, s, c: (n, s, c, 0)),
                   pl.BlockSpec((1, 1, tile_c, 1), lambda n, s, c: (n, s, c, 0))),
        compiler_params=pltpu.CompilerParams(
            dimension_semantics=("parallel", "parallel", "parallel"),
            vmem_limit_bytes=48 * 1024 * 1024),
    )(w_mat, patches)

    # ---- fold BN (train-mode, biased variance) into per-channel scale/shift ---
    cnt = jnp.float32(N * S)   # zero-padded spatial/feature columns contribute 0
    ch_sum = jnp.sum(sum_parts, axis=(0, 1, 3))
    ch_sq = jnp.sum(sq_parts, axis=(0, 1, 3))
    mean = ch_sum / cnt
    var = jnp.maximum(ch_sq / cnt - mean * mean, 0.0)
    gamma_p = jnp.pad(gamma.astype(jnp.float32), (0, C_pad - C_out))
    beta_p = jnp.pad(beta.astype(jnp.float32), (0, C_pad - C_out))
    s = gamma_p * lax.rsqrt(var + eps)
    scale = s.reshape(C_pad, 1)
    shift = (beta_p - mean * s).reshape(C_pad, 1)

    # ---- pass 2: streaming BN affine + ReLU (largest tile that divides S_pad) --
    tile_s2 = tile_s
    budget = 24 * 1024 * 1024          # double-buffered bf16-in + f32-out per block
    for mult in (8, 4, 2):
        cand = tile_s * mult
        if S_pad % cand == 0 and C_pad * cand * (2 + 4) * 2 <= budget:
            tile_s2 = cand
            break

    out = pl.pallas_call(
        _bn_relu_kernel,
        out_shape=jax.ShapeDtypeStruct((N, C_pad, S_pad), jnp.float32),
        grid=(N, S_pad // tile_s2),
        in_specs=[pl.BlockSpec((1, C_pad, tile_s2), lambda n, s: (n, 0, s)),
                  pl.BlockSpec((C_pad, 1), lambda n, s: (0, 0)),
                  pl.BlockSpec((C_pad, 1), lambda n, s: (0, 0))],
        out_specs=pl.BlockSpec((1, C_pad, tile_s2), lambda n, s: (n, 0, s)),
        compiler_params=pltpu.CompilerParams(
            dimension_semantics=("parallel", "parallel"),
            vmem_limit_bytes=48 * 1024 * 1024),
    )(conv_out, scale, shift)

    # Free reshape when C_pad==C_out and S_pad==S; otherwise a cheap contiguous
    # slice (no lane-dim relayout anywhere).
    return out[:, :C_out, :S].reshape(N, C_out, H_out, W_out)


def _reference(x, weight, bias, gamma, beta, *, stride, padding, eps=1e-5):
    C_out = weight.shape[0]
    y = lax.conv_general_dilated(
        x, weight, (stride, stride),
        [(padding, padding), (padding, padding)],
        dimension_numbers=('NCHW', 'OIHW', 'NCHW'))
    y = y + bias.reshape(1, C_out, 1, 1)
    mean = y.mean(axis=(0, 2, 3), keepdims=True)
    var = ((y - mean) ** 2).mean(axis=(0, 2, 3), keepdims=True)  # biased, like train BN
    yhat = (y - mean) / jnp.sqrt(var + eps)
    return jnp.maximum(yhat * gamma.reshape(1, C_out, 1, 1)
                       + beta.reshape(1, C_out, 1, 1), 0.0)


if __name__ == "__main__":
    # Small, ConvBlock-consistent shapes: in=4, out=8, k=3.
    N, C_in, C_out, H, W, K = 2, 4, 8, 16, 16, 3

    key = jax.random.PRNGKey(0)
    k1, k2, k3, k4, k5 = jax.random.split(key, 5)
    x = jax.random.normal(k1, (N, C_in, H, W), dtype=jnp.float32)
    weight = 0.1 * jax.random.normal(k2, (C_out, C_in, K, K), dtype=jnp.float32)
    bias = 0.1 * jax.random.normal(k3, (C_out,), dtype=jnp.float32)
    gamma = 1.0 + 0.1 * jax.random.normal(k4, (C_out,), dtype=jnp.float32)
    beta = 0.1 * jax.random.normal(k5, (C_out,), dtype=jnp.float32)

    # Two configs: stride=1 (S == S_pad) and stride=2 (exercises spatial zero-padding).
    for stride, padding in ((1, 1), (2, 1)):
        out = conv_block(x, weight, bias, gamma, beta, stride=stride, padding=padding)
        out = jax.block_until_ready(out)
        ref = _reference(x, weight, bias, gamma, beta, stride=stride, padding=padding)
        assert out.shape == ref.shape, (out.shape, ref.shape)
        err = float(jnp.max(jnp.abs(out - ref)))
        # bf16 MXU inputs + bf16 intermediate, f32 accumulation/stats -> ~1e-2 abs
        # error after BN normalization at these magnitudes.
        assert jnp.allclose(out, ref, rtol=5e-2, atol=5e-2), err

    print("KERNEL_OK")
</pallas_src>

<mosaic_0001>
module attributes {stable_mosaic.version = 11 : i64} {
  func.func @_conv_stats_kernel(%arg0: i32, %arg1: i32, %arg2: i32, %arg3: memref<128x128xbf16, #tpu.memory_space<vmem>>, %arg4: memref<1x128x256xbf16, #tpu.memory_space<vmem>>, %arg5: memref<1x128x256xbf16, #tpu.memory_space<vmem>>, %arg6: memref<1x1x128x1xf32, #tpu.memory_space<vmem>>, %arg7: memref<1x1x128x1xf32, #tpu.memory_space<vmem>>) attributes {dimension_semantics = [#tpu.dimension_semantics<parallel>, #tpu.dimension_semantics<parallel>, #tpu.dimension_semantics<parallel>], iteration_bounds = array<i64: 2, 1, 1>, scalar_prefetch = 0 : i64, scratch_operands = 0 : i64, tpu.core_type = #tpu.core_type<tc>, window_params = [{transform_indices = @transform_0, window_bounds = array<i64: 128, 128>}, {transform_indices = @transform_1, window_bounds = array<i64: 1, 128, 256>}, {transform_indices = @transform_2, window_bounds = array<i64: 1, 128, 256>}, {transform_indices = @transform_3, window_bounds = array<i64: 1, 1, 128, 1>}, {transform_indices = @transform_4, window_bounds = array<i64: 1, 1, 128, 1>}]} {
    %c0 = arith.constant 0 : index
    %c0_0 = arith.constant 0 : index
    %0 = vector.load %arg3[%c0, %c0_0] : memref<128x128xbf16, #tpu.memory_space<vmem>>, vector<128x128xbf16>
    %c0_1 = arith.constant 0 : index
    %c0_2 = arith.constant 0 : index
    %c0_3 = arith.constant 0 : index
    %1 = vector.load %arg4[%c0_1, %c0_2, %c0_3] : memref<1x128x256xbf16, #tpu.memory_space<vmem>>, vector<1x128x256xbf16>
    %2 = vector.shape_cast %1 : vector<1x128x256xbf16> to vector<128x256xbf16>
    %cst = arith.constant dense<0.000000e+00> : vector<128x256xf32>
    %3 = tpu.matmul %0, %2, %cst {dimension_numbers = #tpu.dot_dimension_numbers<[1], [0], [0], [1], [0, 0, 1, 1], [], []>} : vector<128x128xbf16>, vector<128x256xbf16>, vector<128x256xf32> -> vector<128x256xf32>
    %4 = arith.truncf %3 : vector<128x256xf32> to vector<128x256xbf16>
    %c0_4 = arith.constant 0 : index
    %c0_5 = arith.constant 0 : index
    %c0_6 = arith.constant 0 : index
    %5 = vector.load %arg5[%c0_4, %c0_5, %c0_6] : memref<1x128x256xbf16, #tpu.memory_space<vmem>>, vector<1x128x256xbf16>
    %6 = vector.shape_cast %5 : vector<1x128x256xbf16> to vector<128x256xbf16>
    %7 = vector.shape_cast %4 : vector<128x256xbf16> to vector<1x128x256xbf16>
    tpu.vector_store %arg5[%c0_4, %c0_5, %c0_6], %7 {strides = array<i32>} : memref<1x128x256xbf16, #tpu.memory_space<vmem>>, vector<1x128x256xbf16>,
    %cst_7 = arith.constant dense<0.000000e+00> : vector<128xf32>
    %8 = vector.multi_reduction <add>, %3, %cst_7 [1] : vector<128x256xf32> to vector<128xf32>
    %9 = vector.shape_cast %8 : vector<128xf32> to vector<128x1xf32>
    %c0_8 = arith.constant 0 : index
    %c0_9 = arith.constant 0 : index
    %c0_10 = arith.constant 0 : index
    %c0_11 = arith.constant 0 : index
    %10 = vector.load %arg6[%c0_8, %c0_9, %c0_10, %c0_11] : memref<1x1x128x1xf32, #tpu.memory_space<vmem>>, vector<1x1x128x1xf32>
    %11 = vector.shape_cast %10 : vector<1x1x128x1xf32> to vector<128x1xf32>
    %12 = vector.shape_cast %9 : vector<128x1xf32> to vector<1x1x128x1xf32>
    tpu.vector_store %arg6[%c0_8, %c0_9, %c0_10, %c0_11], %12 {strides = array<i32>} : memref<1x1x128x1xf32, #tpu.memory_space<vmem>>, vector<1x1x128x1xf32>,
    %13 = arith.mulf %3, %3 : vector<128x256xf32>
    %cst_12 = arith.constant dense<0.000000e+00> : vector<128xf32>
    %14 = vector.multi_reduction <add>, %13, %cst_12 [1] : vector<128x256xf32> to vector<128xf32>
    %15 = vector.shape_cast %14 : vector<128xf32> to vector<128x1xf32>
    %c0_13 = arith.constant 0 : index
    %c0_14 = arith.constant 0 : index
    %c0_15 = arith.constant 0 : index
    %c0_16 = arith.constant 0 : index
    %16 = vector.load %arg7[%c0_13, %c0_14, %c0_15, %c0_16] : memref<1x1x128x1xf32, #tpu.memory_space<vmem>>, vector<1x1x128x1xf32>
    %17 = vector.shape_cast %16 : vector<1x1x128x1xf32> to vector<128x1xf32>
    %18 = vector.shape_cast %15 : vector<128x1xf32> to vector<1x1x128x1xf32>
    tpu.vector_store %arg7[%c0_13, %c0_14, %c0_15, %c0_16], %18 {strides = array<i32>} : memref<1x1x128x1xf32, #tpu.memory_space<vmem>>, vector<1x1x128x1xf32>,
    return
  }
  func.func @transform_0(%arg0: i32, %arg1: i32, %arg2: i32) -> (i32, i32) {
    %c0_i32 = arith.constant 0 : i32
    %c0_i32_0 = arith.constant 0 : i32
    return %arg2, %c0_i32 : i32, i32
  }
  func.func @transform_1(%arg0: i32, %arg1: i32, %arg2: i32) -> (i32, i32, i32) {
    %c0_i32 = arith.constant 0 : i32
    %c0_i32_0 = arith.constant 0 : i32
    return %arg0, %c0_i32, %arg1 : i32, i32, i32
  }
  func.func @transform_2(%arg0: i32, %arg1: i32, %arg2: i32) -> (i32, i32, i32) {
    %c0_i32 = arith.constant 0 : i32
    return %arg0, %arg2, %arg1 : i32, i32, i32
  }
  func.func @transform_3(%arg0: i32, %arg1: i32, %arg2: i32) -> (i32, i32, i32, i32) {
    %c0_i32 = arith.constant 0 : i32
    %c0_i32_0 = arith.constant 0 : i32
    return %arg0, %arg1, %arg2, %c0_i32 : i32, i32, i32, i32
  }
  func.func @transform_4(%arg0: i32, %arg1: i32, %arg2: i32) -> (i32, i32, i32, i32) {
    %c0_i32 = arith.constant 0 : i32
    %c0_i32_0 = arith.constant 0 : i32
    return %arg0, %arg1, %arg2, %c0_i32 : i32, i32, i32, i32
  }
}

module attributes {stable_mosaic.version = 11 : i64} {
  func.func @_bn_relu_kernel(%arg0: i32, %arg1: i32, %arg2: memref<1x128x256xbf16, #tpu.memory_space<vmem>>, %arg3: memref<128x1xf32, #tpu.memory_space<vmem>>, %arg4: memref<128x1xf32, #tpu.memory_space<vmem>>, %arg5: memref<1x128x256xf32, #tpu.memory_space<vmem>>) attributes {dimension_semantics = [#tpu.dimension_semantics<parallel>, #tpu.dimension_semantics<parallel>], iteration_bounds = array<i64: 2, 1>, scalar_prefetch = 0 : i64, scratch_operands = 0 : i64, tpu.core_type = #tpu.core_type<tc>, window_params = [{transform_indices = @transform_0, window_bounds = array<i64: 1, 128, 256>}, {pipeline_mode = #tpu.pipeline_mode<synchronous>, transform_indices = @transform_1, window_bounds = array<i64: 128, 1>}, {pipeline_mode = #tpu.pipeline_mode<synchronous>, transform_indices = @transform_2, window_bounds = array<i64: 128, 1>}, {transform_indices = @transform_3, window_bounds = array<i64: 1, 128, 256>}]} {
    %c0 = arith.constant 0 : index
    %c0_0 = arith.constant 0 : index
    %c0_1 = arith.constant 0 : index
    %0 = vector.load %arg2[%c0, %c0_0, %c0_1] : memref<1x128x256xbf16, #tpu.memory_space<vmem>>, vector<1x128x256xbf16>
    %1 = vector.shape_cast %0 : vector<1x128x256xbf16> to vector<128x256xbf16>
    %2 = arith.extf %1 : vector<128x256xbf16> to vector<128x256xf32>
    %c0_2 = arith.constant 0 : index
    %c0_3 = arith.constant 0 : index
    %3 = vector.load %arg3[%c0_2, %c0_3] : memref<128x1xf32, #tpu.memory_space<vmem>>, vector<128x1xf32>
    %4 = vector.broadcast %3 : vector<128x1xf32> to vector<128x256xf32>
    %5 = arith.mulf %2, %4 : vector<128x256xf32>
    %c0_4 = arith.constant 0 : index
    %c0_5 = arith.constant 0 : index
    %6 = vector.load %arg4[%c0_4, %c0_5] : memref<128x1xf32, #tpu.memory_space<vmem>>, vector<128x1xf32>
    %7 = vector.broadcast %6 : vector<128x1xf32> to vector<128x256xf32>
    %8 = arith.addf %5, %7 : vector<128x256xf32>
    %cst = arith.constant 0.000000e+00 : f32
    %9 = vector.broadcast %cst : f32 to vector<128x256xf32>
    %10 = arith.maximumf %8, %9 : vector<128x256xf32>
    %c0_6 = arith.constant 0 : index
    %c0_7 = arith.constant 0 : index
    %c0_8 = arith.constant 0 : index
    %11 = vector.load %arg5[%c0_6, %c0_7, %c0_8] : memref<1x128x256xf32, #tpu.memory_space<vmem>>, vector<1x128x256xf32>
    %12 = vector.shape_cast %11 : vector<1x128x256xf32> to vector<128x256xf32>
    %13 = vector.shape_cast %10 : vector<128x256xf32> to vector<1x128x256xf32>
    tpu.vector_store %arg5[%c0_6, %c0_7, %c0_8], %13 {strides = array<i32>} : memref<1x128x256xf32, #tpu.memory_space<vmem>>, vector<1x128x256xf32>,
    return
  }
  func.func @transform_0(%arg0: i32, %arg1: i32) -> (i32, i32, i32) {
    %c0_i32 = arith.constant 0 : i32
    %c0_i32_0 = arith.constant 0 : i32
    return %arg0, %c0_i32, %arg1 : i32, i32, i32
  }
  func.func @transform_1(%arg0: i32, %arg1: i32) -> (i32, i32) {
    %c0_i32 = arith.constant 0 : i32
    %c0_i32_0 = arith.constant 0 : i32
    %c0_i32_1 = arith.constant 0 : i32
    return %c0_i32, %c0_i32_0 : i32, i32
  }
  func.func @transform_2(%arg0: i32, %arg1: i32) -> (i32, i32) {
    %c0_i32 = arith.constant 0 : i32
    %c0_i32_0 = arith.constant 0 : i32
    %c0_i32_1 = arith.constant 0 : i32
    return %c0_i32, %c0_i32_0 : i32, i32
  }
  func.func @transform_3(%arg0: i32, %arg1: i32) -> (i32, i32, i32) {
    %c0_i32 = arith.constant 0 : i32
    %c0_i32_0 = arith.constant 0 : i32
    return %arg0, %c0_i32, %arg1 : i32, i32, i32
  }
}

</mosaic_0001>

<llo_original>
// kernel: conv_block.3
$region0: #{conv_block.3}
  #allocation0 [shape = 'u32[]', space=smem, size = 0x4, offset = 0x4, fixed_abs, tag = 'smem constant byte address 0x4 - core index']
  #allocation1 [shape = 'u32[144,128]{1,0:T(1,128)}', space=vmem, size = 0x12000, scoped, tag = 'internal scratch']
  %s0 = inlined_call_operand.vmem [shape: bf16[2,128,256], index: 0, kind: input, shape index: {}]
  %s1 = inlined_call_operand.vmem [shape: f32[128,1], index: 1, kind: input, shape index: {}]
  %s2 = inlined_call_operand.vmem [shape: f32[128,1], index: 2, kind: input, shape index: {}]
  %s3 = inlined_call_operand.vmem [shape: f32[2,128,256], index: 3, kind: output, shape index: {}]
  %s4 = sld [smem:[#allocation0]]
  $region45: #{conv_block.3} parent=0
    _
  %s6 = ssub.s32 1, %s4
  %s7 = scalar_select 0, %s6, %s4
  loop: start=0, step=1, limit=4
  $region2: #{conv_block.3} parent=0 // loop_pre_header
    _
  $region3: #{conv_block.3} parent=0 // loop_header
    %s9 = sphi 0, %s13
    %p10 = scmp.ge.s32.totalorder %s9, 4
    %s16 = sphi 0, %s28
    %s17 = sphi 0, %s24
    %s18 = sphi 0, %s16
    %s19 = sphi 0, %s17
    %s20 = sphi 0, %s18
    %s21 = sphi 0, %s19
    %s33 = sphi 0, %s35
    %s36 = sphi 0, %s33
    %s37 = sphi 0, %s36
    %s53 = sphi 0, %s37
    %s57 = sphi 0, %s57
    %s59 = sphi 0, %s57
    %s60 = sphi 0, %s59
    %s74 = sphi 0, %s60
    %s78 = sphi 0, %s78
    %s80 = sphi 0, %s78
    %s81 = sphi 0, %s80
    %s95 = sphi 0, %s81
    %s103 = sphi 0, %s105
    %s106 = sphi 0, %s103
    %s107 = sphi 0, %s106
    %s123 = sphi 0, %s107
  $region4: #{conv_block.3} parent=0 // loop_header_branch
    %12 = sbr.rel (%p10) target = $region8
  $region5: #{conv_block.3} parent=0 // loop_body
    %s14 = ssub.s32 %s9, 1
    %s15 = ssub.s32 %s9, 2
    %s22 = sadd.s32 1, %s17
    %p23 = scmp.ge.s32.totalorder %s22, 1
    %s24 = scalar_select %p23, 0, %s22
    %s25 = sadd.s32 1, %s16
    %s26 = scalar_select %p23, %s25, %s16
    %p27 = scmp.ge.s32.totalorder %s26, 2
    %s28 = scalar_select %p27, 0, %s26
    %s29 = ssub.s32 %s16, %s28
    %s30 = ssub.s32 %s17, %s24
    %s31 = sor.u32 %s29, %s30
    %p32 = scmp.eq.s32.totalorder %s31, 0
    %s34 = sadd.s32 %s33, 1
    %s35 = scalar_select %p32, %s33, %s34
    %p38 = pneg %p32
    %p39 = scmp.eq.s32.totalorder %s9, 1
    %p40 = por %p38, %p39
    %p41 = scmp.ne.s32.totalorder %s33, %s36
    %p42 = scmp.eq.s32.totalorder %s9, 0
    %p43 = por %p41, %p42
    %p44 = scmp.ne.s32.totalorder %s33, %s36
    %p45 = scmp.eq.s32.totalorder %s14, 1
    %p46 = por %p44, %p45
    %p47 = scmp.ne.s32.totalorder %s36, %s37
    %p48 = scmp.eq.s32.totalorder %s14, 0
    %p49 = por %p47, %p48
    %p50 = scmp.ne.s32.totalorder %s36, %s37
    %p51 = scmp.eq.s32.totalorder %s15, 1
    %p52 = por %p50, %p51
    %p54 = scmp.ne.s32.totalorder %s37, %s53
    %p55 = scmp.eq.s32.totalorder %s15, 0
    %p56 = por %p54, %p55
    %s58 = sadd.s32 %s57, 1
    %p61 = scmp.eq.s32.totalorder %s9, 1
    %p62 = scmp.ne.s32.totalorder %s57, %s59
    %p63 = scmp.eq.s32.totalorder %s9, 0
    %p64 = por %p62, %p63
    %p65 = scmp.ne.s32.totalorder %s57, %s59
    %p66 = scmp.eq.s32.totalorder %s14, 1
    %p67 = por %p65, %p66
    %p68 = scmp.ne.s32.totalorder %s59, %s60
    %p69 = scmp.eq.s32.totalorder %s14, 0
    %p70 = por %p68, %p69
    %p71 = scmp.ne.s32.totalorder %s59, %s60
    %p72 = scmp.eq.s32.totalorder %s15, 1
    %p73 = por %p71, %p72
    %p75 = scmp.ne.s32.totalorder %s60, %s74
    %p76 = scmp.eq.s32.totalorder %s15, 0
    %p77 = por %p75, %p76
    %s79 = sadd.s32 %s78, 1
    %p82 = scmp.eq.s32.totalorder %s9, 1
    %p83 = scmp.ne.s32.totalorder %s78, %s80
    %p84 = scmp.eq.s32.totalorder %s9, 0
    %p85 = por %p83, %p84
    %p86 = scmp.ne.s32.totalorder %s78, %s80
    %p87 = scmp.eq.s32.totalorder %s14, 1
    %p88 = por %p86, %p87
    %p89 = scmp.ne.s32.totalorder %s80, %s81
    %p90 = scmp.eq.s32.totalorder %s14, 0
    %p91 = por %p89, %p90
    %p92 = scmp.ne.s32.totalorder %s80, %s81
    %p93 = scmp.eq.s32.totalorder %s15, 1
    %p94 = por %p92, %p93
    %p96 = scmp.ne.s32.totalorder %s81, %s95
    %p97 = scmp.eq.s32.totalorder %s15, 0
    %p98 = por %p96, %p97
    %s99 = ssub.s32 %s16, %s28
    %s100 = ssub.s32 %s17, %s24
    %s101 = sor.u32 %s99, %s100
    %p102 = scmp.eq.s32.totalorder %s101, 0
    %s104 = sadd.s32 %s103, 1
    %s105 = scalar_select %p102, %s103, %s104
    %p108 = pneg %p102
    %p109 = scmp.eq.s32.totalorder %s9, 1
    %p110 = por %p108, %p109
    %p111 = scmp.ne.s32.totalorder %s103, %s106
    %p112 = scmp.eq.s32.totalorder %s9, 0
    %p113 = por %p111, %p112
    %p114 = scmp.ne.s32.totalorder %s103, %s106
    %p115 = scmp.eq.s32.totalorder %s14, 1
    %p116 = por %p114, %p115
    %p117 = scmp.ne.s32.totalorder %s106, %s107
    %p118 = scmp.eq.s32.totalorder %s14, 0
    %p119 = por %p117, %p118
    %p120 = scmp.ne.s32.totalorder %s106, %s107
    %p121 = scmp.eq.s32.totalorder %s15, 1
    %p122 = por %p120, %p121
    %p124 = scmp.ne.s32.totalorder %s107, %s123
    %p125 = scmp.eq.s32.totalorder %s15, 0
    %p126 = por %p124, %p125
    %p127 = scmp.le.s32.totalorder 1, %s9
    %p128 = scmp.lt.s32.totalorder %s9, 3
    %p129 = pnand %p127, %p128
    %p130 = pneg %p129
    // Predicated region
    $region9: #{conv_block.3} parent=5 // pred_check
      _
    $region10: #{conv_block.3} parent=5 // pred_check_branch
      %132 = sbr.rel (%p129) target = $region12
    $region11: #{conv_block.3} parent=5 // pred_region
      %s133 = ssub.s32 %s9, 1
      // Predicated region
      $region13: #{conv_block.3} parent=11 // pred_check
        %p134 = pneg %p70
      $region14: #{conv_block.3} parent=11 // pred_check_branch
        %136 = sbr.rel (%p134) target = $region16
      $region15: #{conv_block.3} parent=11 // pred_region
        _
      $region16: #{conv_block.3} parent=11 // pred_fallthru
        _
      // Predicated region
      $region17: #{conv_block.3} parent=11 // pred_check
        %p137 = pneg %p91
      $region18: #{conv_block.3} parent=11 // pred_check_branch
        %139 = sbr.rel (%p137) target = $region20
      $region19: #{conv_block.3} parent=11 // pred_region
        _
      $region20: #{conv_block.3} parent=11 // pred_fallthru
        _
    $region12: #{conv_block.3} parent=5 // pred_fallthru
      _
    %p140 = scmp.lt.s32.totalorder %s9, 2
    // Predicated region
    $region21: #{conv_block.3} parent=5 // pred_check
      %p141 = pneg %p140
    $region22: #{conv_block.3} parent=5 // pred_check_branch
      %143 = sbr.rel (%p141) target = $region24
    $region23: #{conv_block.3} parent=5 // pred_region
      // Predicated region
      $region25: #{conv_block.3} parent=23 // pred_check
        %p144 = pneg %p43
      $region26: #{conv_block.3} parent=23 // pred_check_branch
        %146 = sbr.rel (%p144) target = $region28
      $region27: #{conv_block.3} parent=23 // pred_region
        %s147 = smul.u32 2, %s17
        %p148 = scmp.lt.s32.totalorder %s16, 1
        %s149 = scalar_select %p148, %s16, 1
        %p150 = scmp.lt.s32.totalorder %s147, 1
        %s151 = scalar_select %p150, %s147, 1
        %s152 = smul.addr %s149, 32
        %s153 = sadd.s32 %s151, %s152
        %s154 = smul.addr %s153, 4
        %s155 = scalar_lea.vmem %s0, %s154
        %s156 = smul.u32 2, %s17
      $region28: #{conv_block.3} parent=23 // pred_fallthru
        _
    $region24: #{conv_block.3} parent=5 // pred_fallthru
      _
    %p157 = scmp.le.s32.totalorder 1, %s9
    %p158 = scmp.lt.s32.totalorder %s9, 3
    %p159 = pnand %p157, %p158
    %p160 = pneg %p159
    // Predicated region
    $region29: #{conv_block.3} parent=5 // pred_check
      _
    $region30: #{conv_block.3} parent=5 // pred_check_branch
      %162 = sbr.rel (%p159) target = $region32
    $region31: #{conv_block.3} parent=5 // pred_region
      %s163 = ssub.s32 %s9, 1
      %s164 = smul.u32 2, %s19
      %p165 = scmp.lt.s32.totalorder %s18, 1
      %s166 = scalar_select %p165, %s18, 1
      %p167 = scmp.lt.s32.totalorder %s164, 1
      %s168 = scalar_select %p167, %s164, 1
      %s169 = smul.addr %s166, 32
      %s170 = sadd.s32 %s168, %s169
      %s171 = smul.addr %s170, 4
      %s172 = scalar_lea.vmem %s0, %s171
      %p173 = pneg %p49
      %p174 = pneg %p46
      %p175 = pneg %p70
      %p176 = pneg %p67
      %p177 = pneg %p91
      %p178 = pneg %p88
      %p179 = pneg %p119
      %p180 = pneg %p116
      %s181 = smul.u32 2, %s19
      %p182 = scmp.lt.s32.totalorder %s18, 1
      %s183 = scalar_select %p182, %s18, 1
      %p184 = scmp.lt.s32.totalorder %s181, 1
      %s185 = scalar_select %p184, %s181, 1
      %s186 = smul.addr %s183, 32
      %s187 = sadd.s32 %s185, %s186
      %s188 = smul.addr %s187, 8
      %s189 = scalar_lea.vmem %s3, %s188
      %s190 = smul.u32 2, %s19
      %p191 = scmp.lt.s32.totalorder %s18, 1
      %s192 = scalar_select %p191, %s18, 1
      %p193 = scmp.lt.s32.totalorder %s190, 1
      %s194 = scalar_select %p193, %s190, 1
      %s195 = smul.addr %s192, 32
      %s196 = sadd.s32 %s194, %s195
      %s197 = smul.addr %s196, 4
      %s198 = scalar_lea.vmem %s0, %s197
      %s199 = smul.u32 2, %s19
      %s200 = smul.u32 2, %s19
      %p201 = scmp.lt.s32.totalorder %s18, 1
      %s202 = scalar_select %p201, %s18, 1
      %p203 = scmp.lt.s32.totalorder %s200, 1
      %s204 = scalar_select %p203, %s200, 1
      %s205 = smul.addr %s202, 32
      %s206 = sadd.s32 %s204, %s205
      %s207 = smul.addr %s206, 8
      %s208 = scalar_lea.vmem %s3, %s207
      %s209 = smul.u32 2, %s19
      %v210 = vld [vmem:[%s198] sm:$0xff]
      %v211 = vld [vmem:[%s198 + $0x8] sm:$0xff]
      %v212 = vld [vmem:[%s198 + $0x10] sm:$0xff]
      %v213 = vld [vmem:[%s198 + $0x18] sm:$0xff]
      %v214 = vld [vmem:[%s198 + $0x20] sm:$0xff]
      %v215 = vld [vmem:[%s198 + $0x28] sm:$0xff]
      %v216 = vld [vmem:[%s198 + $0x30] sm:$0xff]
      %v217 = vld [vmem:[%s198 + $0x38] sm:$0xff]
      %v218 = vld [vmem:[%s198 + $0x40] sm:$0xff]
      %v219 = vld [vmem:[%s198 + $0x48] sm:$0xff]
      %v220 = vld [vmem:[%s198 + $0x50] sm:$0xff]
      %v221 = vld [vmem:[%s198 + $0x58] sm:$0xff]
      %v222 = vld [vmem:[%s198 + $0x60] sm:$0xff]
      %v223 = vld [vmem:[%s198 + $0x68] sm:$0xff]
      %v224 = vld [vmem:[%s198 + $0x70] sm:$0xff]
      %v225 = vld [vmem:[%s198 + $0x78] sm:$0xff]
      %v226 = vunpack.c.l.bf16 %v210
      %v227 = vunpack.c.h.bf16 %v210
      %v228 = vunpack.c.l.bf16 %v211
      %v229 = vunpack.c.h.bf16 %v211
      %v230 = vunpack.c.l.bf16 %v212
      %v231 = vunpack.c.h.bf16 %v212
      %v232 = vunpack.c.l.bf16 %v213
      %v233 = vunpack.c.h.bf16 %v213
      %v234 = vunpack.c.l.bf16 %v214
      %v235 = vunpack.c.h.bf16 %v214
      %v236 = vunpack.c.l.bf16 %v215
      %v237 = vunpack.c.h.bf16 %v215
      %v238 = vunpack.c.l.bf16 %v216
      %v239 = vunpack.c.h.bf16 %v216
      %v240 = vunpack.c.l.bf16 %v217
      %v241 = vunpack.c.h.bf16 %v217
      %v242 = vunpack.c.l.bf16 %v218
      %v243 = vunpack.c.h.bf16 %v218
      %v244 = vunpack.c.l.bf16 %v219
      %v245 = vunpack.c.h.bf16 %v219
      %v246 = vunpack.c.l.bf16 %v220
      %v247 = vunpack.c.h.bf16 %v220
      %v248 = vunpack.c.l.bf16 %v221
      %v249 = vunpack.c.h.bf16 %v221
      %v250 = vunpack.c.l.bf16 %v222
      %v251 = vunpack.c.h.bf16 %v222
      %v252 = vunpack.c.l.bf16 %v223
      %v253 = vunpack.c.h.bf16 %v223
      %v254 = vunpack.c.l.bf16 %v224
      %v255 = vunpack.c.h.bf16 %v224
      %v256 = vunpack.c.l.bf16 %v225
      %v257 = vunpack.c.h.bf16 %v225
      %v258 = vld [vmem:[%s1] sm:$0xff]
      %v259 = vld [vmem:[%s1 + $0x8] sm:$0xff]
      %v260 = vld [vmem:[%s1 + $0x10] sm:$0xff]
      %v261 = vld [vmem:[%s1 + $0x18] sm:$0xff]
      %v262 = vld [vmem:[%s1 + $0x20] sm:$0xff]
      %v263 = vld [vmem:[%s1 + $0x28] sm:$0xff]
      %v264 = vld [vmem:[%s1 + $0x30] sm:$0xff]
      %v265 = vld [vmem:[%s1 + $0x38] sm:$0xff]
      %v266 = vld [vmem:[%s1 + $0x40] sm:$0xff]
      %v267 = vld [vmem:[%s1 + $0x48] sm:$0xff]
      %v268 = vld [vmem:[%s1 + $0x50] sm:$0xff]
      %v269 = vld [vmem:[%s1 + $0x58] sm:$0xff]
      %v270 = vld [vmem:[%s1 + $0x60] sm:$0xff]
      %v271 = vld [vmem:[%s1 + $0x68] sm:$0xff]
      %v272 = vld [vmem:[%s1 + $0x70] sm:$0xff]
      %v273 = vld [vmem:[%s1 + $0x78] sm:$0xff]
      %275 = vset.pattern.permute.xlu0 0
      %276 = vperm.xlu0 %275, %v258
      %v277 = vpop.permute.xlu0 %276
      %280 = vset.pattern.permute.xlu0 0
      %281 = vperm.xlu0 %280, %v259
      %v282 = vpop.permute.xlu0 %281
      %285 = vset.pattern.permute.xlu0 0
      %286 = vperm.xlu0 %285, %v260
      %v287 = vpop.permute.xlu0 %286
      %290 = vset.pattern.permute.xlu0 0
      %291 = vperm.xlu0 %290, %v261
      %v292 = vpop.permute.xlu0 %291
      %295 = vset.pattern.permute.xlu0 0
      %296 = vperm.xlu0 %295, %v262
      %v297 = vpop.permute.xlu0 %296
      %300 = vset.pattern.permute.xlu0 0
      %301 = vperm.xlu0 %300, %v263
      %v302 = vpop.permute.xlu0 %301
      %305 = vset.pattern.permute.xlu0 0
      %306 = vperm.xlu0 %305, %v264
      %v307 = vpop.permute.xlu0 %306
      %310 = vset.pattern.permute.xlu0 0
      %311 = vperm.xlu0 %310, %v265
      %v312 = vpop.permute.xlu0 %311
      %315 = vset.pattern.permute.xlu0 0
      %316 = vperm.xlu0 %315, %v266
      %v317 = vpop.permute.xlu0 %316
      %320 = vset.pattern.permute.xlu0 0
      %321 = vperm.xlu0 %320, %v267
      %v322 = vpop.permute.xlu0 %321
      %325 = vset.pattern.permute.xlu0 0
      %326 = vperm.xlu0 %325, %v268
      %v327 = vpop.permute.xlu0 %326
      %330 = vset.pattern.permute.xlu0 0
      %331 = vperm.xlu0 %330, %v269
      %v332 = vpop.permute.xlu0 %331
      %335 = vset.pattern.permute.xlu0 0
      %336 = vperm.xlu0 %335, %v270
      %v337 = vpop.permute.xlu0 %336
      %340 = vset.pattern.permute.xlu0 0
      %341 = vperm.xlu0 %340, %v271
      %v342 = vpop.permute.xlu0 %341
      %345 = vset.pattern.permute.xlu0 0
      %346 = vperm.xlu0 %345, %v272
      %v347 = vpop.permute.xlu0 %346
      %350 = vset.pattern.permute.xlu0 0
      %351 = vperm.xlu0 %350, %v273
      %v352 = vpop.permute.xlu0 %351
      %v354 = vmul.f32 %v226, %v277
      %v355 = vmul.f32 %v227, %v277
      %v356 = vmul.f32 %v228, %v282
      %v357 = vmul.f32 %v229, %v282
      %v358 = vmul.f32 %v230, %v287
      %v359 = vmul.f32 %v231, %v287
      %v360 = vmul.f32 %v232, %v292
      %v361 = vmul.f32 %v233, %v292
      %v362 = vmul.f32 %v234, %v297
      %v363 = vmul.f32 %v235, %v297
      %v364 = vmul.f32 %v236, %v302
      %v365 = vmul.f32 %v237, %v302
      %v366 = vmul.f32 %v238, %v307
      %v367 = vmul.f32 %v239, %v307
      %v368 = vmul.f32 %v240, %v312
      %v369 = vmul.f32 %v241, %v312
      %v370 = vmul.f32 %v242, %v317
      %v371 = vmul.f32 %v243, %v317
      %v372 = vmul.f32 %v244, %v322
      %v373 = vmul.f32 %v245, %v322
      %v374 = vmul.f32 %v246, %v327
      %v375 = vmul.f32 %v247, %v327
      %v376 = vmul.f32 %v248, %v332
      %v377 = vmul.f32 %v249, %v332
      %v378 = vmul.f32 %v250, %v337
      %v379 = vmul.f32 %v251, %v337
      %v380 = vmul.f32 %v252, %v342
      %v381 = vmul.f32 %v253, %v342
      %v382 = vmul.f32 %v254, %v347
      %v383 = vmul.f32 %v255, %v347
      %v384 = vmul.f32 %v256, %v352
      %v385 = vmul.f32 %v257, %v352
      %v386 = vld [vmem:[%s2] sm:$0xff]
      %v387 = vld [vmem:[%s2 + $0x8] sm:$0xff]
      %v388 = vld [vmem:[%s2 + $0x10] sm:$0xff]
      %v389 = vld [vmem:[%s2 + $0x18] sm:$0xff]
      %v390 = vld [vmem:[%s2 + $0x20] sm:$0xff]
      %v391 = vld [vmem:[%s2 + $0x28] sm:$0xff]
      %v392 = vld [vmem:[%s2 + $0x30] sm:$0xff]
      %v393 = vld [vmem:[%s2 + $0x38] sm:$0xff]
      %v394 = vld [vmem:[%s2 + $0x40] sm:$0xff]
      %v395 = vld [vmem:[%s2 + $0x48] sm:$0xff]
      %v396 = vld [vmem:[%s2 + $0x50] sm:$0xff]
      %v397 = vld [vmem:[%s2 + $0x58] sm:$0xff]
      %v398 = vld [vmem:[%s2 + $0x60] sm:$0xff]
      %v399 = vld [vmem:[%s2 + $0x68] sm:$0xff]
      %v400 = vld [vmem:[%s2 + $0x70] sm:$0xff]
      %v401 = vld [vmem:[%s2 + $0x78] sm:$0xff]
      %403 = vset.pattern.permute.xlu0 0
      %404 = vperm.xlu0 %403, %v386
      %v405 = vpop.permute.xlu0 %404
      %408 = vset.pattern.permute.xlu0 0
      %409 = vperm.xlu0 %408, %v387
      %v410 = vpop.permute.xlu0 %409
      %413 = vset.pattern.permute.xlu0 0
      %414 = vperm.xlu0 %413, %v388
      %v415 = vpop.permute.xlu0 %414
      %418 = vset.pattern.permute.xlu0 0
      %419 = vperm.xlu0 %418, %v389
      %v420 = vpop.permute.xlu0 %419
      %423 = vset.pattern.permute.xlu0 0
      %424 = vperm.xlu0 %423, %v390
      %v425 = vpop.permute.xlu0 %424
      %428 = vset.pattern.permute.xlu0 0
      %429 = vperm.xlu0 %428, %v391
      %v430 = vpop.permute.xlu0 %429
      %433 = vset.pattern.permute.xlu0 0
      %434 = vperm.xlu0 %433, %v392
      %v435 = vpop.permute.xlu0 %434
      %438 = vset.pattern.permute.xlu0 0
      %439 = vperm.xlu0 %438, %v393
      %v440 = vpop.permute.xlu0 %439
      %443 = vset.pattern.permute.xlu0 0
      %444 = vperm.xlu0 %443, %v394
      %v445 = vpop.permute.xlu0 %444
      %448 = vset.pattern.permute.xlu0 0
      %449 = vperm.xlu0 %448, %v395
      %v450 = vpop.permute.xlu0 %449
      %453 = vset.pattern.permute.xlu0 0
      %454 = vperm.xlu0 %453, %v396
      %v455 = vpop.permute.xlu0 %454
      %458 = vset.pattern.permute.xlu0 0
      %459 = vperm.xlu0 %458, %v397
      %v460 = vpop.permute.xlu0 %459
      %463 = vset.pattern.permute.xlu0 0
      %464 = vperm.xlu0 %463, %v398
      %v465 = vpop.permute.xlu0 %464
      %468 = vset.pattern.permute.xlu0 0
      %469 = vperm.xlu0 %468, %v399
      %v470 = vpop.permute.xlu0 %469
      %473 = vset.pattern.permute.xlu0 0
      %474 = vperm.xlu0 %473, %v400
      %v475 = vpop.permute.xlu0 %474
      %478 = vset.pattern.permute.xlu0 0
      %479 = vperm.xlu0 %478, %v401
      %v480 = vpop.permute.xlu0 %479
      %v482 = vadd.f32 %v354, %v405
      %v483 = vadd.f32 %v355, %v405
      %v484 = vadd.f32 %v356, %v410
      %v485 = vadd.f32 %v357, %v410
      %v486 = vadd.f32 %v358, %v415
      %v487 = vadd.f32 %v359, %v415
      %v488 = vadd.f32 %v360, %v420
      %v489 = vadd.f32 %v361, %v420
      %v490 = vadd.f32 %v362, %v425
      %v491 = vadd.f32 %v363, %v425
      %v492 = vadd.f32 %v364, %v430
      %v493 = vadd.f32 %v365, %v430
      %v494 = vadd.f32 %v366, %v435
      %v495 = vadd.f32 %v367, %v435
      %v496 = vadd.f32 %v368, %v440
      %v497 = vadd.f32 %v369, %v440
      %v498 = vadd.f32 %v370, %v445
      %v499 = vadd.f32 %v371, %v445
      %v500 = vadd.f32 %v372, %v450
      %v501 = vadd.f32 %v373, %v450
      %v502 = vadd.f32 %v374, %v455
      %v503 = vadd.f32 %v375, %v455
      %v504 = vadd.f32 %v376, %v460
      %v505 = vadd.f32 %v377, %v460
      %v506 = vadd.f32 %v378, %v465
      %v507 = vadd.f32 %v379, %v465
      %v508 = vadd.f32 %v380, %v470
      %v509 = vadd.f32 %v381, %v470
      %v510 = vadd.f32 %v382, %v475
      %v511 = vadd.f32 %v383, %v475
      %v512 = vadd.f32 %v384, %v480
      %v513 = vadd.f32 %v385, %v480
      %v514 = vmax.f32 %v482, 0.0
      %v515 = vmax.f32 %v483, 0.0
      %v516 = vmax.f32 %v484, 0.0
      %v517 = vmax.f32 %v485, 0.0
      %v518 = vmax.f32 %v486, 0.0
      %v519 = vmax.f32 %v487, 0.0
      %v520 = vmax.f32 %v488, 0.0
      %v521 = vmax.f32 %v489, 0.0
      %v522 = vmax.f32 %v490, 0.0
      %v523 = vmax.f32 %v491, 0.0
      %v524 = vmax.f32 %v492, 0.0
      %v525 = vmax.f32 %v493, 0.0
      %v526 = vmax.f32 %v494, 0.0
      %v527 = vmax.f32 %v495, 0.0
      %v528 = vmax.f32 %v496, 0.0
      %v529 = vmax.f32 %v497, 0.0
      %v530 = vmax.f32 %v498, 0.0
      %v531 = vmax.f32 %v499, 0.0
      %v532 = vmax.f32 %v500, 0.0
      %v533 = vmax.f32 %v501, 0.0
      %v534 = vmax.f32 %v502, 0.0
      %v535 = vmax.f32 %v503, 0.0
      %v536 = vmax.f32 %v504, 0.0
      %v537 = vmax.f32 %v505, 0.0
      %v538 = vmax.f32 %v506, 0.0
      %v539 = vmax.f32 %v507, 0.0
      %v540 = vmax.f32 %v508, 0.0
      %v541 = vmax.f32 %v509, 0.0
      %v542 = vmax.f32 %v510, 0.0
      %v543 = vmax.f32 %v511, 0.0
      %v544 = vmax.f32 %v512, 0.0
      %v545 = vmax.f32 %v513, 0.0
      %546 = vst [vmem:[%s208] sm:$0xff] %v514
      %547 = vst [vmem:[%s208 + $0x8] sm:$0xff] %v515
      %548 = vst [vmem:[%s208 + $0x10] sm:$0xff] %v516
      %549 = vst [vmem:[%s208 + $0x18] sm:$0xff] %v517
      %550 = vst [vmem:[%s208 + $0x20] sm:$0xff] %v518
      %551 = vst [vmem:[%s208 + $0x28] sm:$0xff] %v519
      %552 = vst [vmem:[%s208 + $0x30] sm:$0xff] %v520
      %553 = vst [vmem:[%s208 + $0x38] sm:$0xff] %v521
      %554 = vst [vmem:[%s208 + $0x40] sm:$0xff] %v522
      %555 = vst [vmem:[%s208 + $0x48] sm:$0xff] %v523
      %556 = vst [vmem:[%s208 + $0x50] sm:$0xff] %v524
      %557 = vst [vmem:[%s208 + $0x58] sm:$0xff] %v525
      %558 = vst [vmem:[%s208 + $0x60] sm:$0xff] %v526
      %559 = vst [vmem:[%s208 + $0x68] sm:$0xff] %v527
      %560 = vst [vmem:[%s208 + $0x70] sm:$0xff] %v528
      %561 = vst [vmem:[%s208 + $0x78] sm:$0xff] %v529
      %562 = vst [vmem:[%s208 + $0x80] sm:$0xff] %v530
      %563 = vst [vmem:[%s208 + $0x88] sm:$0xff] %v531
      %564 = vst [vmem:[%s208 + $0x90] sm:$0xff] %v532
      %565 = vst [vmem:[%s208 + $0x98] sm:$0xff] %v533
      %566 = vst [vmem:[%s208 + $0xa0] sm:$0xff] %v534
      %567 = vst [vmem:[%s208 + $0xa8] sm:$0xff] %v535
      %568 = vst [vmem:[%s208 + $0xb0] sm:$0xff] %v536
      %569 = vst [vmem:[%s208 + $0xb8] sm:$0xff] %v537
      %570 = vst [vmem:[%s208 + $0xc0] sm:$0xff] %v538
      %571 = vst [vmem:[%s208 + $0xc8] sm:$0xff] %v539
      %572 = vst [vmem:[%s208 + $0xd0] sm:$0xff] %v540
      %573 = vst [vmem:[%s208 + $0xd8] sm:$0xff] %v541
      %574 = vst [vmem:[%s208 + $0xe0] sm:$0xff] %v542
      %575 = vst [vmem:[%s208 + $0xe8] sm:$0xff] %v543
      %576 = vst [vmem:[%s208 + $0xf0] sm:$0xff] %v544
      %577 = vst [vmem:[%s208 + $0xf8] sm:$0xff] %v545
      %s578 = smul.u32 2, %s19
      %p579 = scmp.lt.s32.totalorder %s18, 1
      %s580 = scalar_select %p579, %s18, 1
      %p581 = scmp.lt.s32.totalorder %s578, 1
      %s582 = scalar_select %p581, %s578, 1
      %s583 = smul.addr %s580, 32
      %s584 = sadd.s32 %s582, %s583
      %s585 = smul.addr %s584, 8
      %s586 = scalar_lea.vmem %s3, %s585
      // Predicated region
      $region33: #{conv_block.3} parent=31 // pred_check
        %p587 = pneg %p116
      $region34: #{conv_block.3} parent=31 // pred_check_branch
        %589 = sbr.rel (%p587) target = $region36
      $region35: #{conv_block.3} parent=31 // pred_region
        %s590 = smul.u32 2, %s19
      $region36: #{conv_block.3} parent=31 // pred_fallthru
        _
    $region32: #{conv_block.3} parent=5 // pred_fallthru
      _
    %p591 = scmp.le.s32.totalorder 2, %s9
    // Predicated region
    $region37: #{conv_block.3} parent=5 // pred_check
      %p592 = pneg %p591
    $region38: #{conv_block.3} parent=5 // pred_check_branch
      %594 = sbr.rel (%p592) target = $region40
    $region39: #{conv_block.3} parent=5 // pred_region
      %s595 = ssub.s32 %s9, 2
      // Predicated region
      $region41: #{conv_block.3} parent=39 // pred_check
        %p596 = pneg %p122
      $region42: #{conv_block.3} parent=39 // pred_check_branch
        %598 = sbr.rel (%p596) target = $region44
      $region43: #{conv_block.3} parent=39 // pred_region
        %s599 = smul.u32 2, %s21
        %p600 = scmp.lt.s32.totalorder %s20, 1
        %s601 = scalar_select %p600, %s20, 1
        %p602 = scmp.lt.s32.totalorder %s599, 1
        %s603 = scalar_select %p602, %s599, 1
        %s604 = smul.addr %s601, 32
        %s605 = sadd.s32 %s603, %s604
        %s606 = smul.addr %s605, 8
        %s607 = scalar_lea.vmem %s3, %s606
      $region44: #{conv_block.3} parent=39 // pred_fallthru
        _
    $region40: #{conv_block.3} parent=5 // pred_fallthru
      _
  $region6: #{conv_block.3} parent=0 // loop_footer
    %s13 = sadd.s32 1, %s9
  $region7: #{conv_block.3} parent=0 // loop_footer_branch
    %8 = sbr.rel target = $region3
  $region8: #{conv_block.3} parent=0 // loop_exit
    _

// kernel: conv_block.2
$region0: #{conv_block.2}
  #allocation0 [shape = 'u32[]', space=smem, size = 0x4, offset = 0x4, fixed_abs, tag = 'smem constant byte address 0x4 - core index']
  #allocation1 [shape = 'u32[144,128]{1,0:T(1,128)}', space=vmem, size = 0x12000, scoped, tag = 'internal scratch']
  %s0 = inlined_call_operand.vmem [shape: bf16[128,128], index: 0, kind: input, shape index: {}]
  %s1 = inlined_call_operand.vmem [shape: bf16[2,128,256], index: 1, kind: input, shape index: {}]
  %s2 = inlined_call_operand.vmem [shape: bf16[2,128,256], index: 2, kind: output, shape index: {0}]
  %s3 = inlined_call_operand.vmem [shape: f32[2,1,128,1], index: 3, kind: output, shape index: {1}]
  %s4 = inlined_call_operand.vmem [shape: f32[2,1,128,1], index: 4, kind: output, shape index: {2}]
  %5 = xla_tuple %s2, %s3, %s4
  %s6 = sld [smem:[#allocation0]]
  $region57: #{conv_block.2} parent=0
    _
  %s8 = ssub.s32 1, %s6
  %s9 = scalar_select 0, %s8, %s6
  loop: start=0, step=1, limit=4
  $region2: #{conv_block.2} parent=0 // loop_pre_header
    _
  $region3: #{conv_block.2} parent=0 // loop_header
    %s11 = sphi 0, %s15
    %p12 = scmp.ge.s32.totalorder %s11, 4
    %s18 = sphi 0, %s37
    %s19 = sphi 0, %s33
    %s20 = sphi 0, %s29
    %s21 = sphi 0, %s18
    %s22 = sphi 0, %s19
    %s23 = sphi 0, %s20
    %s24 = sphi 0, %s21
    %s25 = sphi 0, %s22
    %s26 = sphi 0, %s23
    %s40 = sphi 0, %s42
    %s43 = sphi 0, %s40
    %s44 = sphi 0, %s43
    %s60 = sphi 0, %s44
    %s68 = sphi 0, %s70
    %s71 = sphi 0, %s68
    %s72 = sphi 0, %s71
    %s88 = sphi 0, %s72
    %s98 = sphi 0, %s100
    %s101 = sphi 0, %s98
    %s102 = sphi 0, %s101
    %s118 = sphi 0, %s102
    %s128 = sphi 0, %s130
    %s131 = sphi 0, %s128
    %s132 = sphi 0, %s131
    %s148 = sphi 0, %s132
    %s158 = sphi 0, %s160
    %s161 = sphi 0, %s158
    %s162 = sphi 0, %s161
    %s178 = sphi 0, %s162
  $region4: #{conv_block.2} parent=0 // loop_header_branch
    %14 = sbr.rel (%p12) target = $region8
  $region5: #{conv_block.2} parent=0 // loop_body
    %s16 = ssub.s32 %s11, 1
    %s17 = ssub.s32 %s11, 2
    %s27 = sadd.s32 1, %s20
    %p28 = scmp.ge.s32.totalorder %s27, 1
    %s29 = scalar_select %p28, 0, %s27
    %s30 = sadd.s32 1, %s19
    %s31 = scalar_select %p28, %s30, %s19
    %p32 = scmp.ge.s32.totalorder %s31, 1
    %s33 = scalar_select %p32, 0, %s31
    %s34 = sadd.s32 1, %s18
    %s35 = scalar_select %p32, %s34, %s18
    %p36 = scmp.ge.s32.totalorder %s35, 2
    %s37 = scalar_select %p36, 0, %s35
    %s38 = ssub.s32 %s20, %s29
    %p39 = scmp.eq.s32.totalorder %s38, 0
    %s41 = sadd.s32 %s40, 1
    %s42 = scalar_select %p39, %s40, %s41
    %p45 = pneg %p39
    %p46 = scmp.eq.s32.totalorder %s11, 1
    %p47 = por %p45, %p46
    %p48 = scmp.ne.s32.totalorder %s40, %s43
    %p49 = scmp.eq.s32.totalorder %s11, 0
    %p50 = por %p48, %p49
    %p51 = scmp.ne.s32.totalorder %s40, %s43
    %p52 = scmp.eq.s32.totalorder %s16, 1
    %p53 = por %p51, %p52
    %p54 = scmp.ne.s32.totalorder %s43, %s44
    %p55 = scmp.eq.s32.totalorder %s16, 0
    %p56 = por %p54, %p55
    %p57 = scmp.ne.s32.totalorder %s43, %s44
    %p58 = scmp.eq.s32.totalorder %s17, 1
    %p59 = por %p57, %p58
    %p61 = scmp.ne.s32.totalorder %s44, %s60
    %p62 = scmp.eq.s32.totalorder %s17, 0
    %p63 = por %p61, %p62
    %s64 = ssub.s32 %s18, %s37
    %s65 = ssub.s32 %s19, %s33
    %s66 = sor.u32 %s64, %s65
    %p67 = scmp.eq.s32.totalorder %s66, 0
    %s69 = sadd.s32 %s68, 1
    %s70 = scalar_select %p67, %s68, %s69
    %p73 = pneg %p67
    %p74 = scmp.eq.s32.totalorder %s11, 1
    %p75 = por %p73, %p74
    %p76 = scmp.ne.s32.totalorder %s68, %s71
    %p77 = scmp.eq.s32.totalorder %s11, 0
    %p78 = por %p76, %p77
    %p79 = scmp.ne.s32.totalorder %s68, %s71
    %p80 = scmp.eq.s32.totalorder %s16, 1
    %p81 = por %p79, %p80
    %p82 = scmp.ne.s32.totalorder %s71, %s72
    %p83 = scmp.eq.s32.totalorder %s16, 0
    %p84 = por %p82, %p83
    %p85 = scmp.ne.s32.totalorder %s71, %s72
    %p86 = scmp.eq.s32.totalorder %s17, 1
    %p87 = por %p85, %p86
    %p89 = scmp.ne.s32.totalorder %s72, %s88
    %p90 = scmp.eq.s32.totalorder %s17, 0
    %p91 = por %p89, %p90
    %s92 = ssub.s32 %s18, %s37
    %s93 = ssub.s32 %s20, %s29
    %s94 = sor.u32 %s92, %s93
    %s95 = ssub.s32 %s19, %s33
    %s96 = sor.u32 %s94, %s95
    %p97 = scmp.eq.s32.totalorder %s96, 0
    %s99 = sadd.s32 %s98, 1
    %s100 = scalar_select %p97, %s98, %s99
    %p103 = pneg %p97
    %p104 = scmp.eq.s32.totalorder %s11, 1
    %p105 = por %p103, %p104
    %p106 = scmp.ne.s32.totalorder %s98, %s101
    %p107 = scmp.eq.s32.totalorder %s11, 0
    %p108 = por %p106, %p107
    %p109 = scmp.ne.s32.totalorder %s98, %s101
    %p110 = scmp.eq.s32.totalorder %s16, 1
    %p111 = por %p109, %p110
    %p112 = scmp.ne.s32.totalorder %s101, %s102
    %p113 = scmp.eq.s32.totalorder %s16, 0
    %p114 = por %p112, %p113
    %p115 = scmp.ne.s32.totalorder %s101, %s102
    %p116 = scmp.eq.s32.totalorder %s17, 1
    %p117 = por %p115, %p116
    %p119 = scmp.ne.s32.totalorder %s102, %s118
    %p120 = scmp.eq.s32.totalorder %s17, 0
    %p121 = por %p119, %p120
    %s122 = ssub.s32 %s18, %s37
    %s123 = ssub.s32 %s19, %s33
    %s124 = sor.u32 %s122, %s123
    %s125 = ssub.s32 %s20, %s29
    %s126 = sor.u32 %s124, %s125
    %p127 = scmp.eq.s32.totalorder %s126, 0
    %s129 = sadd.s32 %s128, 1
    %s130 = scalar_select %p127, %s128, %s129
    %p133 = pneg %p127
    %p134 = scmp.eq.s32.totalorder %s11, 1
    %p135 = por %p133, %p134
    %p136 = scmp.ne.s32.totalorder %s128, %s131
    %p137 = scmp.eq.s32.totalorder %s11, 0
    %p138 = por %p136, %p137
    %p139 = scmp.ne.s32.totalorder %s128, %s131
    %p140 = scmp.eq.s32.totalorder %s16, 1
    %p141 = por %p139, %p140
    %p142 = scmp.ne.s32.totalorder %s131, %s132
    %p143 = scmp.eq.s32.totalorder %s16, 0
    %p144 = por %p142, %p143
    %p145 = scmp.ne.s32.totalorder %s131, %s132
    %p146 = scmp.eq.s32.totalorder %s17, 1
    %p147 = por %p145, %p146
    %p149 = scmp.ne.s32.totalorder %s132, %s148
    %p150 = scmp.eq.s32.totalorder %s17, 0
    %p151 = por %p149, %p150
    %s152 = ssub.s32 %s18, %s37
    %s153 = ssub.s32 %s19, %s33
    %s154 = sor.u32 %s152, %s153
    %s155 = ssub.s32 %s20, %s29
    %s156 = sor.u32 %s154, %s155
    %p157 = scmp.eq.s32.totalorder %s156, 0
    %s159 = sadd.s32 %s158, 1
    %s160 = scalar_select %p157, %s158, %s159
    %p163 = pneg %p157
    %p164 = scmp.eq.s32.totalorder %s11, 1
    %p165 = por %p163, %p164
    %p166 = scmp.ne.s32.totalorder %s158, %s161
    %p167 = scmp.eq.s32.totalorder %s11, 0
    %p168 = por %p166, %p167
    %p169 = scmp.ne.s32.totalorder %s158, %s161
    %p170 = scmp.eq.s32.totalorder %s16, 1
    %p171 = por %p169, %p170
    %p172 = scmp.ne.s32.totalorder %s161, %s162
    %p173 = scmp.eq.s32.totalorder %s16, 0
    %p174 = por %p172, %p173
    %p175 = scmp.ne.s32.totalorder %s161, %s162
    %p176 = scmp.eq.s32.totalorder %s17, 1
    %p177 = por %p175, %p176
    %p179 = scmp.ne.s32.totalorder %s162, %s178
    %p180 = scmp.eq.s32.totalorder %s17, 0
    %p181 = por %p179, %p180
    %p182 = scmp.le.s32.totalorder 1, %s11
    %p183 = scmp.lt.s32.totalorder %s11, 3
    %p184 = pnand %p182, %p183
    %p185 = pneg %p184
    // Predicated region
    $region9: #{conv_block.2} parent=5 // pred_check
      _
    $region10: #{conv_block.2} parent=5 // pred_check_branch
      %187 = sbr.rel (%p184) target = $region12
    $region11: #{conv_block.2} parent=5 // pred_region
      %s188 = ssub.s32 %s11, 1
      // Predicated region
      $region13: #{conv_block.2} parent=11 // pred_check
        %p189 = pneg %p56
      $region14: #{conv_block.2} parent=11 // pred_check_branch
        %191 = sbr.rel (%p189) target = $region16
      $region15: #{conv_block.2} parent=11 // pred_region
        %s192 = smul.u32 16, %s23
        %p193 = scmp.lt.s32.totalorder %s192, 15
        %s194 = scalar_select %p193, %s192, 15
        %s195 = smul.addr %s194, 4
        %s196 = scalar_lea.vmem %s0, %s195
        %s197 = smul.u32 16, %s23
      $region16: #{conv_block.2} parent=11 // pred_fallthru
        _
    $region12: #{conv_block.2} parent=5 // pred_fallthru
      _
    %p198 = scmp.lt.s32.totalorder %s11, 2
    // Predicated region
    $region17: #{conv_block.2} parent=5 // pred_check
      %p199 = pneg %p198
    $region18: #{conv_block.2} parent=5 // pred_check_branch
      %201 = sbr.rel (%p199) target = $region20
    $region19: #{conv_block.2} parent=5 // pred_region
      // Predicated region
      $region21: #{conv_block.2} parent=19 // pred_check
        %p202 = pneg %p78
      $region22: #{conv_block.2} parent=19 // pred_check_branch
        %204 = sbr.rel (%p202) target = $region24
      $region23: #{conv_block.2} parent=19 // pred_region
        %s205 = smul.u32 2, %s19
        %p206 = scmp.lt.s32.totalorder %s18, 1
        %s207 = scalar_select %p206, %s18, 1
        %p208 = scmp.lt.s32.totalorder %s205, 1
        %s209 = scalar_select %p208, %s205, 1
        %s210 = smul.addr %s207, 32
        %s211 = sadd.s32 %s209, %s210
        %s212 = smul.addr %s211, 4
        %s213 = scalar_lea.vmem %s1, %s212
        %s214 = smul.u32 2, %s19
      $region24: #{conv_block.2} parent=19 // pred_fallthru
        _
    $region20: #{conv_block.2} parent=5 // pred_fallthru
      _
    %p215 = scmp.le.s32.totalorder 1, %s11
    %p216 = scmp.lt.s32.totalorder %s11, 3
    %p217 = pnand %p215, %p216
    %p218 = pneg %p217
    // Predicated region
    $region25: #{conv_block.2} parent=5 // pred_check
      _
    $region26: #{conv_block.2} parent=5 // pred_check_branch
      %220 = sbr.rel (%p217) target = $region28
    $region27: #{conv_block.2} parent=5 // pred_region
      %s221 = ssub.s32 %s11, 1
      %s222 = smul.u32 16, %s23
      %p223 = scmp.lt.s32.totalorder %s222, 15
      %s224 = scalar_select %p223, %s222, 15
      %s225 = smul.addr %s224, 4
      %s226 = scalar_lea.vmem %s0, %s225
      %p227 = pneg %p56
      %p228 = pneg %p53
      %s229 = smul.u32 2, %s22
      %p230 = scmp.lt.s32.totalorder %s21, 1
      %s231 = scalar_select %p230, %s21, 1
      %p232 = scmp.lt.s32.totalorder %s229, 1
      %s233 = scalar_select %p232, %s229, 1
      %s234 = smul.addr %s231, 32
      %s235 = sadd.s32 %s233, %s234
      %s236 = smul.addr %s235, 4
      %s237 = scalar_lea.vmem %s1, %s236
      %p238 = pneg %p84
      %p239 = pneg %p81
      %p240 = pneg %p114
      %p241 = pneg %p111
      %s242 = smul.u32 16, %s23
      %s243 = smul.u32 2, %s22
      %p244 = scmp.lt.s32.totalorder %s21, 1
      %s245 = scalar_select %p244, %s21, 1
      %p246 = scmp.lt.s32.totalorder %s242, 15
      %s247 = scalar_select %p246, %s242, 15
      %p248 = scmp.lt.s32.totalorder %s243, 1
      %s249 = scalar_select %p248, %s243, 1
      %s250 = smul.addr %s247, 2
      %s251 = sadd.s32 %s249, %s250
      %s252 = smul.addr %s245, 32
      %s253 = sadd.s32 %s251, %s252
      %s254 = smul.addr %s253, 4
      %s255 = scalar_lea.vmem %s2, %s254
      %p256 = pneg %p144
      %p257 = pneg %p141
      %s258 = smul.u32 16, %s23
      %p259 = scmp.lt.s32.totalorder %s21, 1
      %s260 = scalar_select %p259, %s21, 1
      %p261 = scmp.lt.s32.totalorder %s22, 0
      %s262 = scalar_select %p261, %s22, 0
      %p263 = scmp.lt.s32.totalorder %s258, 15
      %s264 = scalar_select %p263, %s258, 15
      %s265 = smul.addr %s262, 16
      %s266 = sadd.s32 %s264, %s265
      %s267 = smul.addr %s260, 16
      %s268 = sadd.s32 %s266, %s267
      %s269 = smul.addr %s268, 8
      %s270 = scalar_lea.vmem %s3, %s269
      %p271 = pneg %p174
      %p272 = pneg %p171
      %s273 = smul.u32 16, %s23
      %p274 = scmp.lt.s32.totalorder %s21, 1
      %s275 = scalar_select %p274, %s21, 1
      %p276 = scmp.lt.s32.totalorder %s22, 0
      %s277 = scalar_select %p276, %s22, 0
      %p278 = scmp.lt.s32.totalorder %s273, 15
      %s279 = scalar_select %p278, %s273, 15
      %s280 = smul.addr %s277, 16
      %s281 = sadd.s32 %s279, %s280
      %s282 = smul.addr %s275, 16
      %s283 = sadd.s32 %s281, %s282
      %s284 = smul.addr %s283, 8
      %s285 = scalar_lea.vmem %s4, %s284
      %s286 = smul.u32 16, %s23
      %p287 = scmp.lt.s32.totalorder %s286, 15
      %s288 = scalar_select %p287, %s286, 15
      %s289 = smul.addr %s288, 4
      %s290 = scalar_lea.vmem %s0, %s289
      %s291 = smul.u32 16, %s23
      %s292 = smul.u32 2, %s22
      %p293 = scmp.lt.s32.totalorder %s21, 1
      %s294 = scalar_select %p293, %s21, 1
      %p295 = scmp.lt.s32.totalorder %s292, 1
      %s296 = scalar_select %p295, %s292, 1
      %s297 = smul.addr %s294, 32
      %s298 = sadd.s32 %s296, %s297
      %s299 = smul.addr %s298, 4
      %s300 = scalar_lea.vmem %s1, %s299
      %s301 = smul.u32 2, %s22
      %s302 = smul.u32 16, %s23
      %s303 = smul.u32 2, %s22
      %p304 = scmp.lt.s32.totalorder %s21, 1
      %s305 = scalar_select %p304, %s21, 1
      %p306 = scmp.lt.s32.totalorder %s302, 15
      %s307 = scalar_select %p306, %s302, 15
      %p308 = scmp.lt.s32.totalorder %s303, 1
      %s309 = scalar_select %p308, %s303, 1
      %s310 = smul.addr %s307, 2
      %s311 = sadd.s32 %s309, %s310
      %s312 = smul.addr %s305, 32
      %s313 = sadd.s32 %s311, %s312
      %s314 = smul.addr %s313, 4
      %s315 = scalar_lea.vmem %s2, %s314
      %s316 = smul.u32 16, %s23
      %s317 = smul.u32 2, %s22
      %s318 = smul.u32 16, %s23
      %p319 = scmp.lt.s32.totalorder %s21, 1
      %s320 = scalar_select %p319, %s21, 1
      %p321 = scmp.lt.s32.totalorder %s22, 0
      %s322 = scalar_select %p321, %s22, 0
      %p323 = scmp.lt.s32.totalorder %s318, 15
      %s324 = scalar_select %p323, %s318, 15
      %s325 = smul.addr %s322, 16
      %s326 = sadd.s32 %s324, %s325
      %s327 = smul.addr %s320, 16
      %s328 = sadd.s32 %s326, %s327
      %s329 = smul.addr %s328, 8
      %s330 = scalar_lea.vmem %s3, %s329
      %s331 = smul.u32 16, %s23
      %s332 = smul.u32 16, %s23
      %p333 = scmp.lt.s32.totalorder %s21, 1
      %s334 = scalar_select %p333, %s21, 1
      %p335 = scmp.lt.s32.totalorder %s22, 0
      %s336 = scalar_select %p335, %s22, 0
      %p337 = scmp.lt.s32.totalorder %s332, 15
      %s338 = scalar_select %p337, %s332, 15
      %s339 = smul.addr %s336, 16
      %s340 = sadd.s32 %s338, %s339
      %s341 = smul.addr %s334, 16
      %s342 = sadd.s32 %s340, %s341
      %s343 = smul.addr %s342, 8
      %s344 = scalar_lea.vmem %s4, %s343
      %s345 = smul.u32 16, %s23
      %v347 = vld [vmem:[%s290] sm:$0xf]
      %v348 = vld [vmem:[%s290 + $0x4] sm:$0xf]
      %v349 = vld [vmem:[%s290 + $0x8] sm:$0xf]
      %v350 = vld [vmem:[%s290 + $0xc] sm:$0xf]
      %v351 = vld [vmem:[%s290 + $0x10] sm:$0xf]
      %v352 = vld [vmem:[%s290 + $0x14] sm:$0xf]
      %v353 = vld [vmem:[%s290 + $0x18] sm:$0xf]
      %v354 = vld [vmem:[%s290 + $0x1c] sm:$0xf]
      %v355 = vld [vmem:[%s290 + $0x20] sm:$0xf]
      %v356 = vld [vmem:[%s290 + $0x24] sm:$0xf]
      %v357 = vld [vmem:[%s290 + $0x28] sm:$0xf]
      %v358 = vld [vmem:[%s290 + $0x2c] sm:$0xf]
      %v359 = vld [vmem:[%s290 + $0x30] sm:$0xf]
      %v360 = vld [vmem:[%s290 + $0x34] sm:$0xf]
      %v361 = vld [vmem:[%s290 + $0x38] sm:$0xf]
      %v362 = vld [vmem:[%s290 + $0x3c] sm:$0xf]
      %v363 = vld [vmem:[%s300] sm:$0xff]
      %v364 = vld [vmem:[%s300 + $0x8] sm:$0xff]
      %v365 = vld [vmem:[%s300 + $0x10] sm:$0xff]
      %v366 = vld [vmem:[%s300 + $0x18] sm:$0xff]
      %v367 = vld [vmem:[%s300 + $0x20] sm:$0xff]
      %v368 = vld [vmem:[%s300 + $0x28] sm:$0xff]
      %v369 = vld [vmem:[%s300 + $0x30] sm:$0xff]
      %v370 = vld [vmem:[%s300 + $0x38] sm:$0xff]
      %v371 = vld [vmem:[%s300 + $0x40] sm:$0xff]
      %v372 = vld [vmem:[%s300 + $0x48] sm:$0xff]
      %v373 = vld [vmem:[%s300 + $0x50] sm:$0xff]
      %v374 = vld [vmem:[%s300 + $0x58] sm:$0xff]
      %v375 = vld [vmem:[%s300 + $0x60] sm:$0xff]
      %v376 = vld [vmem:[%s300 + $0x68] sm:$0xff]
      %v377 = vld [vmem:[%s300 + $0x70] sm:$0xff]
      %v378 = vld [vmem:[%s300 + $0x78] sm:$0xff]
      %v395 = vunpack.c.l.b16 %v347
      %v396 = vunpack.c.l.b16 %v348
      %v397 = vunpack.c.l.b16 %v349
      %v398 = vunpack.c.l.b16 %v350
      %v399 = vunpack.c.l.b16 %v351
      %v400 = vunpack.c.l.b16 %v352
      %v401 = vunpack.c.l.b16 %v353
      %v402 = vunpack.c.l.b16 %v354
      %v403 = vunpack.c.l.b16 %v355
      %v404 = vunpack.c.l.b16 %v356
      %v405 = vunpack.c.l.b16 %v357
      %v406 = vunpack.c.l.b16 %v358
      %v407 = vunpack.c.l.b16 %v359
      %v408 = vunpack.c.l.b16 %v360
      %v409 = vunpack.c.l.b16 %v361
      %v410 = vunpack.c.l.b16 %v362
      %v411 = vpack.c.b16 %v396, %v395
      %v412 = vpack.c.b16 %v398, %v397
      %v413 = vpack.c.b16 %v400, %v399
      %v414 = vpack.c.b16 %v402, %v401
      %v415 = vpack.c.b16 %v404, %v403
      %v416 = vpack.c.b16 %v406, %v405
      %v417 = vpack.c.b16 %v408, %v407
      %v418 = vpack.c.b16 %v410, %v409
      %v443 = vunpack.c.l.b16 %v363
      %v444 = vunpack.c.h.b16 %v363
      %v445 = vunpack.c.l.b16 %v364
      %v446 = vunpack.c.h.b16 %v364
      %v447 = vunpack.c.l.b16 %v365
      %v448 = vunpack.c.h.b16 %v365
      %v449 = vunpack.c.l.b16 %v366
      %v450 = vunpack.c.h.b16 %v366
      %v451 = vunpack.c.l.b16 %v367
      %v452 = vunpack.c.h.b16 %v367
      %v453 = vunpack.c.l.b16 %v368
      %v454 = vunpack.c.h.b16 %v368
      %v455 = vunpack.c.l.b16 %v369
      %v456 = vunpack.c.h.b16 %v369
      %v457 = vunpack.c.l.b16 %v370
      %v458 = vunpack.c.h.b16 %v370
      %v459 = vunpack.c.l.b16 %v371
      %v460 = vunpack.c.h.b16 %v371
      %v461 = vunpack.c.l.b16 %v372
      %v462 = vunpack.c.h.b16 %v372
      %v463 = vunpack.c.l.b16 %v373
      %v464 = vunpack.c.h.b16 %v373
      %v465 = vunpack.c.l.b16 %v374
      %v466 = vunpack.c.h.b16 %v374
      %v467 = vunpack.c.l.b16 %v375
      %v468 = vunpack.c.h.b16 %v375
      %v469 = vunpack.c.l.b16 %v376
      %v470 = vunpack.c.h.b16 %v376
      %v471 = vunpack.c.l.b16 %v377
      %v472 = vunpack.c.h.b16 %v377
      %v473 = vunpack.c.l.b16 %v378
      %v474 = vunpack.c.h.b16 %v378
      %v475 = vpack.c.b16 %v445, %v443
      %v476 = vpack.c.b16 %v446, %v444
      %v477 = vpack.c.b16 %v449, %v447
      %v478 = vpack.c.b16 %v450, %v448
      %v479 = vpack.c.b16 %v453, %v451
      %v480 = vpack.c.b16 %v454, %v452
      %v481 = vpack.c.b16 %v457, %v455
      %v482 = vpack.c.b16 %v458, %v456
      %v483 = vpack.c.b16 %v461, %v459
      %v484 = vpack.c.b16 %v462, %v460
      %v485 = vpack.c.b16 %v465, %v463
      %v486 = vpack.c.b16 %v466, %v464
      %v487 = vpack.c.b16 %v469, %v467
      %v488 = vpack.c.b16 %v470, %v468
      %v489 = vpack.c.b16 %v473, %v471
      %v490 = vpack.c.b16 %v474, %v472
      %507 = vmatprep.subr.bf16.mxu0 %v490
      %508 = vmatpush1.bf16.msra.mxu0 %v489
      %509 = vmatprep.subr.bf16.mxu0 %v488
      %510 = vmatpush1.bf16.msra.mxu0 %v487
      %511 = vmatprep.subr.bf16.mxu0 %v486
      %512 = vmatpush1.bf16.msra.mxu0 %v485
      %513 = vmatprep.subr.bf16.mxu0 %v484
      %514 = vmatpush1.bf16.msra.mxu0 %v483
      %515 = vmatprep.subr.bf16.mxu0 %v482
      %516 = vmatpush1.bf16.msra.mxu0 %v481
      %517 = vmatprep.subr.bf16.mxu0 %v480
      %518 = vmatpush1.bf16.msra.mxu0 %v479
      %519 = vmatprep.subr.bf16.mxu0 %v478
      %520 = vmatpush1.bf16.msra.mxu0 %v477
      %521 = vmatprep.subr.bf16.mxu0 %v476
      %522 = vmatpush1.bf16.msra.mxu0 %v475
      %523 = vmatprep.subr.bf16.mxu0 0
      %524 = vmatpush2.bf16.msra.mxu0 0
      %525 = vmatprep.subr.bf16.mxu0 0
      %526 = vmatpush2.bf16.msra.mxu0 0
      %527 = vmatprep.subr.bf16.mxu0 0
      %528 = vmatpush2.bf16.msra.mxu0 0
      %529 = vmatprep.subr.bf16.mxu0 0
      %530 = vmatpush2.bf16.msra.mxu0 0
      %531 = vmatprep.subr.bf16.mxu0 0
      %532 = vmatpush2.bf16.msra.mxu0 0
      %533 = vmatprep.subr.bf16.mxu0 0
      %534 = vmatpush2.bf16.msra.mxu0 0
      %535 = vmatprep.subr.bf16.mxu0 0
      %536 = vmatpush2.bf16.msra.mxu0 0
      %537 = vmatprep.subr.bf16.mxu0 0
      %538 = vmatpush2.bf16.msra.mxu0 0
      %539 = vmatprep.mubr.bf16.mxu0 0
      %540 = vmatmul.mubr.bf16.gmra.mxu0 %v411
      %v541 = vpop.f32.mrf.mxu0
      %v542 = vadd.f32 0.0, %v541
      %v543 = vpop.f32.mrf.mxu0
      %v544 = vadd.f32 0.0, %v543
      %v545 = vpop.f32.mrf.mxu0
      %v546 = vadd.f32 0.0, %v545
      %v547 = vpop.f32.mrf.mxu0
      %v548 = vadd.f32 0.0, %v547
      %549 = vmatprep.mubr.bf16.mxu0 0
      %550 = vmatmul.mubr.bf16.gmra.mxu0 %v412
      %v551 = vpop.f32.mrf.mxu0
      %v552 = vadd.f32 0.0, %v551
      %v553 = vpop.f32.mrf.mxu0
      %v554 = vadd.f32 0.0, %v553
      %v555 = vpop.f32.mrf.mxu0
      %v556 = vadd.f32 0.0, %v555
      %v557 = vpop.f32.mrf.mxu0
      %v558 = vadd.f32 0.0, %v557
      %559 = vmatprep.mubr.bf16.mxu0 0
      %560 = vmatmul.mubr.bf16.gmra.mxu0 %v413
      %v561 = vpop.f32.mrf.mxu0
      %v562 = vadd.f32 0.0, %v561
      %v563 = vpop.f32.mrf.mxu0
      %v564 = vadd.f32 0.0, %v563
      %v565 = vpop.f32.mrf.mxu0
      %v566 = vadd.f32 0.0, %v565
      %v567 = vpop.f32.mrf.mxu0
      %v568 = vadd.f32 0.0, %v567
      %569 = vmatprep.mubr.bf16.mxu0 0
      %570 = vmatmul.mubr.bf16.gmra.mxu0 %v414
      %v571 = vpop.f32.mrf.mxu0
      %v572 = vadd.f32 0.0, %v571
      %v573 = vpop.f32.mrf.mxu0
      %v574 = vadd.f32 0.0, %v573
      %v575 = vpop.f32.mrf.mxu0
      %v576 = vadd.f32 0.0, %v575
      %v577 = vpop.f32.mrf.mxu0
      %v578 = vadd.f32 0.0, %v577
      %579 = vmatprep.mubr.bf16.mxu0 0
      %580 = vmatmul.mubr.bf16.gmra.mxu0 %v415
      %v581 = vpop.f32.mrf.mxu0
      %v582 = vadd.f32 0.0, %v581
      %v583 = vpop.f32.mrf.mxu0
      %v584 = vadd.f32 0.0, %v583
      %v585 = vpop.f32.mrf.mxu0
      %v586 = vadd.f32 0.0, %v585
      %v587 = vpop.f32.mrf.mxu0
      %v588 = vadd.f32 0.0, %v587
      %589 = vmatprep.mubr.bf16.mxu0 0
      %590 = vmatmul.mubr.bf16.gmra.mxu0 %v416
      %v591 = vpop.f32.mrf.mxu0
      %v592 = vadd.f32 0.0, %v591
      %v593 = vpop.f32.mrf.mxu0
      %v594 = vadd.f32 0.0, %v593
      %v595 = vpop.f32.mrf.mxu0
      %v596 = vadd.f32 0.0, %v595
      %v597 = vpop.f32.mrf.mxu0
      %v598 = vadd.f32 0.0, %v597
      %599 = vmatprep.mubr.bf16.mxu0 0
      %600 = vmatmul.mubr.bf16.gmra.mxu0 %v417
      %v601 = vpop.f32.mrf.mxu0
      %v602 = vadd.f32 0.0, %v601
      %v603 = vpop.f32.mrf.mxu0
      %v604 = vadd.f32 0.0, %v603
      %v605 = vpop.f32.mrf.mxu0
      %v606 = vadd.f32 0.0, %v605
      %v607 = vpop.f32.mrf.mxu0
      %v608 = vadd.f32 0.0, %v607
      %609 = vmatprep.mubr.bf16.mxu0 0
      %610 = vmatmul.mubr.bf16.gmra.mxu0 %v418
      %v611 = vpop.f32.mrf.mxu0
      %v612 = vadd.f32 0.0, %v611
      %v613 = vpop.f32.mrf.mxu0
      %v614 = vadd.f32 0.0, %v613
      %v615 = vpop.f32.mrf.mxu0
      %v616 = vadd.f32 0.0, %v615
      %v617 = vpop.f32.mrf.mxu0
      %v618 = vadd.f32 0.0, %v617
      %619 = vdwg.mxu0
      %v620 = vpack.c.bf16 %v546, %v542
      %v621 = vpack.c.bf16 %v548, %v544
      %v622 = vpack.c.bf16 %v556, %v552
      %v623 = vpack.c.bf16 %v558, %v554
      %v624 = vpack.c.bf16 %v566, %v562
      %v625 = vpack.c.bf16 %v568, %v564
      %v626 = vpack.c.bf16 %v576, %v572
      %v627 = vpack.c.bf16 %v578, %v574
      %v628 = vpack.c.bf16 %v586, %v582
      %v629 = vpack.c.bf16 %v588, %v584
      %v630 = vpack.c.bf16 %v596, %v592
      %v631 = vpack.c.bf16 %v598, %v594
      %v632 = vpack.c.bf16 %v606, %v602
      %v633 = vpack.c.bf16 %v608, %v604
      %v634 = vpack.c.bf16 %v616, %v612
      %v635 = vpack.c.bf16 %v618, %v614
      %v652 = vunpack.c.l.b16 %v620
      %v653 = vunpack.c.l.b16 %v621
      %v654 = vunpack.c.h.b16 %v620
      %v655 = vunpack.c.h.b16 %v621
      %v656 = vunpack.c.l.b16 %v622
      %v657 = vunpack.c.l.b16 %v623
      %v658 = vunpack.c.h.b16 %v622
      %v659 = vunpack.c.h.b16 %v623
      %v660 = vunpack.c.l.b16 %v624
      %v661 = vunpack.c.l.b16 %v625
      %v662 = vunpack.c.h.b16 %v624
      %v663 = vunpack.c.h.b16 %v625
      %v664 = vunpack.c.l.b16 %v626
      %v665 = vunpack.c.l.b16 %v627
      %v666 = vunpack.c.h.b16 %v626
      %v667 = vunpack.c.h.b16 %v627
      %v668 = vunpack.c.l.b16 %v628
      %v669 = vunpack.c.l.b16 %v629
      %v670 = vunpack.c.h.b16 %v628
      %v671 = vunpack.c.h.b16 %v629
      %v672 = vunpack.c.l.b16 %v630
      %v673 = vunpack.c.l.b16 %v631
      %v674 = vunpack.c.h.b16 %v630
      %v675 = vunpack.c.h.b16 %v631
      %v676 = vunpack.c.l.b16 %v632
      %v677 = vunpack.c.l.b16 %v633
      %v678 = vunpack.c.h.b16 %v632
      %v679 = vunpack.c.h.b16 %v633
      %v680 = vunpack.c.l.b16 %v634
      %v681 = vunpack.c.l.b16 %v635
      %v682 = vunpack.c.h.b16 %v634
      %v683 = vunpack.c.h.b16 %v635
      %v684 = vpack.c.b16 %v653, %v652
      %v685 = vpack.c.b16 %v655, %v654
      %v686 = vpack.c.b16 %v657, %v656
      %v687 = vpack.c.b16 %v659, %v658
      %v688 = vpack.c.b16 %v661, %v660
      %v689 = vpack.c.b16 %v663, %v662
      %v690 = vpack.c.b16 %v665, %v664
      %v691 = vpack.c.b16 %v667, %v666
      %v692 = vpack.c.b16 %v669, %v668
      %v693 = vpack.c.b16 %v671, %v670
      %v694 = vpack.c.b16 %v673, %v672
      %v695 = vpack.c.b16 %v675, %v674
      %v696 = vpack.c.b16 %v677, %v676
      %v697 = vpack.c.b16 %v679, %v678
      %v698 = vpack.c.b16 %v681, %v680
      %v699 = vpack.c.b16 %v683, %v682
      %716 = vst [vmem:[%s315] sm:$0xff] %v684
      %717 = vst [vmem:[%s315 + $0x8] sm:$0xff] %v685
      %718 = vst [vmem:[%s315 + $0x10] sm:$0xff] %v686
      %719 = vst [vmem:[%s315 + $0x18] sm:$0xff] %v687
      %720 = vst [vmem:[%s315 + $0x20] sm:$0xff] %v688
      %721 = vst [vmem:[%s315 + $0x28] sm:$0xff] %v689
      %722 = vst [vmem:[%s315 + $0x30] sm:$0xff] %v690
      %723 = vst [vmem:[%s315 + $0x38] sm:$0xff] %v691
      %724 = vst [vmem:[%s315 + $0x40] sm:$0xff] %v692
      %725 = vst [vmem:[%s315 + $0x48] sm:$0xff] %v693
      %726 = vst [vmem:[%s315 + $0x50] sm:$0xff] %v694
      %727 = vst [vmem:[%s315 + $0x58] sm:$0xff] %v695
      %728 = vst [vmem:[%s315 + $0x60] sm:$0xff] %v696
      %729 = vst [vmem:[%s315 + $0x68] sm:$0xff] %v697
      %730 = vst [vmem:[%s315 + $0x70] sm:$0xff] %v698
      %731 = vst [vmem:[%s315 + $0x78] sm:$0xff] %v699
      %v732 = vadd.f32 %v542, %v544
      %733 = vadd.xlane.f32.xlu0 %v732
      %v734 = vpop.xlane.xlu0 %733
      %v735 = vadd.f32 %v546, %v548
      %736 = vadd.xlane.f32.xlu0 %v735
      %v737 = vpop.xlane.xlu0 %736
      %v738 = vadd.f32 %v552, %v554
      %739 = vadd.xlane.f32.xlu0 %v738
      %v740 = vpop.xlane.xlu0 %739
      %v741 = vadd.f32 %v556, %v558
      %742 = vadd.xlane.f32.xlu0 %v741
      %v743 = vpop.xlane.xlu0 %742
      %v744 = vadd.f32 %v562, %v564
      %745 = vadd.xlane.f32.xlu0 %v744
      %v746 = vpop.xlane.xlu0 %745
      %v747 = vadd.f32 %v566, %v568
      %748 = vadd.xlane.f32.xlu0 %v747
      %v749 = vpop.xlane.xlu0 %748
      %v750 = vadd.f32 %v572, %v574
      %751 = vadd.xlane.f32.xlu0 %v750
      %v752 = vpop.xlane.xlu0 %751
      %v753 = vadd.f32 %v576, %v578
      %754 = vadd.xlane.f32.xlu0 %v753
      %v755 = vpop.xlane.xlu0 %754
      %v756 = vadd.f32 %v582, %v584
      %757 = vadd.xlane.f32.xlu0 %v756
      %v758 = vpop.xlane.xlu0 %757
      %v759 = vadd.f32 %v586, %v588
      %760 = vadd.xlane.f32.xlu0 %v759
      %v761 = vpop.xlane.xlu0 %760
      %v762 = vadd.f32 %v592, %v594
      %763 = vadd.xlane.f32.xlu0 %v762
      %v764 = vpop.xlane.xlu0 %763
      %v765 = vadd.f32 %v596, %v598
      %766 = vadd.xlane.f32.xlu0 %v765
      %v767 = vpop.xlane.xlu0 %766
      %v768 = vadd.f32 %v602, %v604
      %769 = vadd.xlane.f32.xlu0 %v768
      %v770 = vpop.xlane.xlu0 %769
      %v771 = vadd.f32 %v606, %v608
      %772 = vadd.xlane.f32.xlu0 %v771
      %v773 = vpop.xlane.xlu0 %772
      %v774 = vadd.f32 %v612, %v614
      %775 = vadd.xlane.f32.xlu0 %v774
      %v776 = vpop.xlane.xlu0 %775
      %v777 = vadd.f32 %v616, %v618
      %778 = vadd.xlane.f32.xlu0 %v777
      %v779 = vpop.xlane.xlu0 %778
      %vm780 = vcmask 7168
      %781 = vst.msk [vmem:[%s330] sm:$0xff] %vm780, %v734
      %782 = vst.msk [vmem:[%s330 + $0x8] sm:$0xff] %vm780, %v737
      %783 = vst.msk [vmem:[%s330 + $0x10] sm:$0xff] %vm780, %v740
      %784 = vst.msk [vmem:[%s330 + $0x18] sm:$0xff] %vm780, %v743
      %785 = vst.msk [vmem:[%s330 + $0x20] sm:$0xff] %vm780, %v746
      %786 = vst.msk [vmem:[%s330 + $0x28] sm:$0xff] %vm780, %v749
      %787 = vst.msk [vmem:[%s330 + $0x30] sm:$0xff] %vm780, %v752
      %788 = vst.msk [vmem:[%s330 + $0x38] sm:$0xff] %vm780, %v755
      %789 = vst.msk [vmem:[%s330 + $0x40] sm:$0xff] %vm780, %v758
      %790 = vst.msk [vmem:[%s330 + $0x48] sm:$0xff] %vm780, %v761
      %791 = vst.msk [vmem:[%s330 + $0x50] sm:$0xff] %vm780, %v764
      %792 = vst.msk [vmem:[%s330 + $0x58] sm:$0xff] %vm780, %v767
      %793 = vst.msk [vmem:[%s330 + $0x60] sm:$0xff] %vm780, %v770
      %794 = vst.msk [vmem:[%s330 + $0x68] sm:$0xff] %vm780, %v773
      %795 = vst.msk [vmem:[%s330 + $0x70] sm:$0xff] %vm780, %v776
      %796 = vst.msk [vmem:[%s330 + $0x78] sm:$0xff] %vm780, %v779
      %v797 = vmul.f32 %v542, %v542
      %v798 = vmul.f32 %v544, %v544
      %v799 = vmul.f32 %v546, %v546
      %v800 = vmul.f32 %v548, %v548
      %v801 = vmul.f32 %v552, %v552
      %v802 = vmul.f32 %v554, %v554
      %v803 = vmul.f32 %v556, %v556
      %v804 = vmul.f32 %v558, %v558
      %v805 = vmul.f32 %v562, %v562
      %v806 = vmul.f32 %v564, %v564
      %v807 = vmul.f32 %v566, %v566
      %v808 = vmul.f32 %v568, %v568
      %v809 = vmul.f32 %v572, %v572
      %v810 = vmul.f32 %v574, %v574
      %v811 = vmul.f32 %v576, %v576
      %v812 = vmul.f32 %v578, %v578
      %v813 = vmul.f32 %v582, %v582
      %v814 = vmul.f32 %v584, %v584
      %v815 = vmul.f32 %v586, %v586
      %v816 = vmul.f32 %v588, %v588
      %v817 = vmul.f32 %v592, %v592
      %v818 = vmul.f32 %v594, %v594
      %v819 = vmul.f32 %v596, %v596
      %v820 = vmul.f32 %v598, %v598
      %v821 = vmul.f32 %v602, %v602
      %v822 = vmul.f32 %v604, %v604
      %v823 = vmul.f32 %v606, %v606
      %v824 = vmul.f32 %v608, %v608
      %v825 = vmul.f32 %v612, %v612
      %v826 = vmul.f32 %v614, %v614
      %v827 = vmul.f32 %v616, %v616
      %v828 = vmul.f32 %v618, %v618
      %v829 = vadd.f32 %v797, %v798
      %830 = vadd.xlane.f32.xlu0 %v829
      %v831 = vpop.xlane.xlu0 %830
      %v832 = vadd.f32 %v799, %v800
      %833 = vadd.xlane.f32.xlu0 %v832
      %v834 = vpop.xlane.xlu0 %833
      %v835 = vadd.f32 %v801, %v802
      %836 = vadd.xlane.f32.xlu0 %v835
      %v837 = vpop.xlane.xlu0 %836
      %v838 = vadd.f32 %v803, %v804
      %839 = vadd.xlane.f32.xlu0 %v838
      %v840 = vpop.xlane.xlu0 %839
      %v841 = vadd.f32 %v805, %v806
      %842 = vadd.xlane.f32.xlu0 %v841
      %v843 = vpop.xlane.xlu0 %842
      %v844 = vadd.f32 %v807, %v808
      %845 = vadd.xlane.f32.xlu0 %v844
      %v846 = vpop.xlane.xlu0 %845
      %v847 = vadd.f32 %v809, %v810
      %848 = vadd.xlane.f32.xlu0 %v847
      %v849 = vpop.xlane.xlu0 %848
      %v850 = vadd.f32 %v811, %v812
      %851 = vadd.xlane.f32.xlu0 %v850
      %v852 = vpop.xlane.xlu0 %851
      %v853 = vadd.f32 %v813, %v814
      %854 = vadd.xlane.f32.xlu0 %v853
      %v855 = vpop.xlane.xlu0 %854
      %v856 = vadd.f32 %v815, %v816
      %857 = vadd.xlane.f32.xlu0 %v856
      %v858 = vpop.xlane.xlu0 %857
      %v859 = vadd.f32 %v817, %v818
      %860 = vadd.xlane.f32.xlu0 %v859
      %v861 = vpop.xlane.xlu0 %860
      %v862 = vadd.f32 %v819, %v820
      %863 = vadd.xlane.f32.xlu0 %v862
      %v864 = vpop.xlane.xlu0 %863
      %v865 = vadd.f32 %v821, %v822
      %866 = vadd.xlane.f32.xlu0 %v865
      %v867 = vpop.xlane.xlu0 %866
      %v868 = vadd.f32 %v823, %v824
      %869 = vadd.xlane.f32.xlu0 %v868
      %v870 = vpop.xlane.xlu0 %869
      %v871 = vadd.f32 %v825, %v826
      %872 = vadd.xlane.f32.xlu0 %v871
      %v873 = vpop.xlane.xlu0 %872
      %v874 = vadd.f32 %v827, %v828
      %875 = vadd.xlane.f32.xlu0 %v874
      %v876 = vpop.xlane.xlu0 %875
      %877 = vst.msk [vmem:[%s344] sm:$0xff] %vm780, %v831
      %878 = vst.msk [vmem:[%s344 + $0x8] sm:$0xff] %vm780, %v834
      %879 = vst.msk [vmem:[%s344 + $0x10] sm:$0xff] %vm780, %v837
      %880 = vst.msk [vmem:[%s344 + $0x18] sm:$0xff] %vm780, %v840
      %881 = vst.msk [vmem:[%s344 + $0x20] sm:$0xff] %vm780, %v843
      %882 = vst.msk [vmem:[%s344 + $0x28] sm:$0xff] %vm780, %v846
      %883 = vst.msk [vmem:[%s344 + $0x30] sm:$0xff] %vm780, %v849
      %884 = vst.msk [vmem:[%s344 + $0x38] sm:$0xff] %vm780, %v852
      %885 = vst.msk [vmem:[%s344 + $0x40] sm:$0xff] %vm780, %v855
      %886 = vst.msk [vmem:[%s344 + $0x48] sm:$0xff] %vm780, %v858
      %887 = vst.msk [vmem:[%s344 + $0x50] sm:$0xff] %vm780, %v861
      %888 = vst.msk [vmem:[%s344 + $0x58] sm:$0xff] %vm780, %v864
      %889 = vst.msk [vmem:[%s344 + $0x60] sm:$0xff] %vm780, %v867
      %890 = vst.msk [vmem:[%s344 + $0x68] sm:$0xff] %vm780, %v870
      %891 = vst.msk [vmem:[%s344 + $0x70] sm:$0xff] %vm780, %v873
      %892 = vst.msk [vmem:[%s344 + $0x78] sm:$0xff] %vm780, %v876
      %s893 = smul.u32 16, %s23
      %s894 = smul.u32 2, %s22
      %p895 = scmp.lt.s32.totalorder %s21, 1
      %s896 = scalar_select %p895, %s21, 1
      %p897 = scmp.lt.s32.totalorder %s893, 15
      %s898 = scalar_select %p897, %s893, 15
      %p899 = scmp.lt.s32.totalorder %s894, 1
      %s900 = scalar_select %p899, %s894, 1
      %s901 = smul.addr %s898, 2
      %s902 = sadd.s32 %s900, %s901
      %s903 = smul.addr %s896, 32
      %s904 = sadd.s32 %s902, %s903
      %s905 = smul.addr %s904, 4
      %s906 = scalar_lea.vmem %s2, %s905
      %s907 = smul.u32 16, %s23
      %p908 = scmp.lt.s32.totalorder %s21, 1
      %s909 = scalar_select %p908, %s21, 1
      %p910 = scmp.lt.s32.totalorder %s22, 0
      %s911 = scalar_select %p910, %s22, 0
      %p912 = scmp.lt.s32.totalorder %s907, 15
      %s913 = scalar_select %p912, %s907, 15
      %s914 = smul.addr %s911, 16
      %s915 = sadd.s32 %s913, %s914
      %s916 = smul.addr %s909, 16
      %s917 = sadd.s32 %s915, %s916
      %s918 = smul.addr %s917, 8
      %s919 = scalar_lea.vmem %s3, %s918
      %s920 = smul.u32 16, %s23
      %p921 = scmp.lt.s32.totalorder %s21, 1
      %s922 = scalar_select %p921, %s21, 1
      %p923 = scmp.lt.s32.totalorder %s22, 0
      %s924 = scalar_select %p923, %s22, 0
      %p925 = scmp.lt.s32.totalorder %s920, 15
      %s926 = scalar_select %p925, %s920, 15
      %s927 = smul.addr %s924, 16
      %s928 = sadd.s32 %s926, %s927
      %s929 = smul.addr %s922, 16
      %s930 = sadd.s32 %s928, %s929
      %s931 = smul.addr %s930, 8
      %s932 = scalar_lea.vmem %s4, %s931
      // Predicated region
      $region29: #{conv_block.2} parent=27 // pred_check
        %p933 = pneg %p111
      $region30: #{conv_block.2} parent=27 // pred_check_branch
        %935 = sbr.rel (%p933) target = $region32
      $region31: #{conv_block.2} parent=27 // pred_region
        %s936 = smul.u32 16, %s23
        %s937 = smul.u32 2, %s22
      $region32: #{conv_block.2} parent=27 // pred_fallthru
        _
      // Predicated region
      $region33: #{conv_block.2} parent=27 // pred_check
        %p938 = pneg %p141
      $region34: #{conv_block.2} parent=27 // pred_check_branch
        %940 = sbr.rel (%p938) target = $region36
      $region35: #{conv_block.2} parent=27 // pred_region
        %s941 = smul.u32 16, %s23
      $region36: #{conv_block.2} parent=27 // pred_fallthru
        _
      // Predicated region
      $region37: #{conv_block.2} parent=27 // pred_check
        %p942 = pneg %p171
      $region38: #{conv_block.2} parent=27 // pred_check_branch
        %944 = sbr.rel (%p942) target = $region40
      $region39: #{conv_block.2} parent=27 // pred_region
        %s945 = smul.u32 16, %s23
      $region40: #{conv_block.2} parent=27 // pred_fallthru
        _
    $region28: #{conv_block.2} parent=5 // pred_fallthru
      _
    %p946 = scmp.le.s32.totalorder 2, %s11
    // Predicated region
    $region41: #{conv_block.2} parent=5 // pred_check
      %p947 = pneg %p946
    $region42: #{conv_block.2} parent=5 // pred_check_branch
      %949 = sbr.rel (%p947) target = $region44
    $region43: #{conv_block.2} parent=5 // pred_region
      %s950 = ssub.s32 %s11, 2
      // Predicated region
      $region45: #{conv_block.2} parent=43 // pred_check
        %p951 = pneg %p117
      $region46: #{conv_block.2} parent=43 // pred_check_branch
        %953 = sbr.rel (%p951) target = $region48
      $region47: #{conv_block.2} parent=43 // pred_region
        %s954 = smul.u32 16, %s26
        %s955 = smul.u32 2, %s25
        %p956 = scmp.lt.s32.totalorder %s24, 1
        %s957 = scalar_select %p956, %s24, 1
        %p958 = scmp.lt.s32.totalorder %s954, 15
        %s959 = scalar_select %p958, %s954, 15
        %p960 = scmp.lt.s32.totalorder %s955, 1
        %s961 = scalar_select %p960, %s955, 1
        %s962 = smul.addr %s959, 2
        %s963 = sadd.s32 %s961, %s962
        %s964 = smul.addr %s957, 32
        %s965 = sadd.s32 %s963, %s964
        %s966 = smul.addr %s965, 4
        %s967 = scalar_lea.vmem %s2, %s966
      $region48: #{conv_block.2} parent=43 // pred_fallthru
        _
      // Predicated region
      $region49: #{conv_block.2} parent=43 // pred_check
        %p968 = pneg %p147
      $region50: #{conv_block.2} parent=43 // pred_check_branch
        %970 = sbr.rel (%p968) target = $region52
      $region51: #{conv_block.2} parent=43 // pred_region
        %s971 = smul.u32 16, %s26
        %p972 = scmp.lt.s32.totalorder %s24, 1
        %s973 = scalar_select %p972, %s24, 1
        %p974 = scmp.lt.s32.totalorder %s25, 0
        %s975 = scalar_select %p974, %s25, 0
        %p976 = scmp.lt.s32.totalorder %s971, 15
        %s977 = scalar_select %p976, %s971, 15
        %s978 = smul.addr %s975, 16
        %s979 = sadd.s32 %s977, %s978
        %s980 = smul.addr %s973, 16
        %s981 = sadd.s32 %s979, %s980
        %s982 = smul.addr %s981, 8
        %s983 = scalar_lea.vmem %s3, %s982
      $region52: #{conv_block.2} parent=43 // pred_fallthru
        _
      // Predicated region
      $region53: #{conv_block.2} parent=43 // pred_check
        %p984 = pneg %p177
      $region54: #{conv_block.2} parent=43 // pred_check_branch
        %986 = sbr.rel (%p984) target = $region56
      $region55: #{conv_block.2} parent=43 // pred_region
        %s987 = smul.u32 16, %s26
        %p988 = scmp.lt.s32.totalorder %s24, 1
        %s989 = scalar_select %p988, %s24, 1
        %p990 = scmp.lt.s32.totalorder %s25, 0
        %s991 = scalar_select %p990, %s25, 0
        %p992 = scmp.lt.s32.totalorder %s987, 15
        %s993 = scalar_select %p992, %s987, 15
        %s994 = smul.addr %s991, 16
        %s995 = sadd.s32 %s993, %s994
        %s996 = smul.addr %s989, 16
        %s997 = sadd.s32 %s995, %s996
        %s998 = smul.addr %s997, 8
        %s999 = scalar_lea.vmem %s4, %s998
      $region56: #{conv_block.2} parent=43 // pred_fallthru
        _
    $region44: #{conv_block.2} parent=5 // pred_fallthru
      _
  $region6: #{conv_block.2} parent=0 // loop_footer
    %s15 = sadd.s32 1, %s11
  $region7: #{conv_block.2} parent=0 // loop_footer_branch
    %10 = sbr.rel target = $region3
  $region8: #{conv_block.2} parent=0 // loop_exit
    _

</llo_original>
